<compile_context>
chip_gen: v7x
topology: tpu7x:2x2x1
jax: 0.10.0
libtpu: 0.0.40
codegen_flags: <defaults>
</compile_context>

<pallas_src>
import functools

import jax
import jax.numpy as jnp
from jax import lax
from jax.experimental import pallas as pl
from jax.experimental.pallas import tpu as pltpu


_VMEM_LIMIT = 48 * 1024 * 1024          # < v7x physical 64 MiB, > v5e 16 MiB scoped default
_REC_VMEM_BUDGET = 24 * 1024 * 1024     # budget for the recurrence chunk buffers


# ----------------------------------------------------------------------------- helpers
def _round_up(n, m):
    return ((n + m - 1) // m) * m


def _largest_divisor(n, cap, mult):
    """Largest d <= cap with d % mult == 0 and n % d == 0 (assumes n % mult == 0)."""
    d = (min(n, cap) // mult) * mult
    while d > mult:
        if n % d == 0:
            return d
        d -= mult
    return mult


def _pick_tile(n, cap, mult):
    """Return (tile, padded_n): tile is a multiple of `mult`, tile <= max(cap, mult),
    tile divides padded_n, padded_n >= n.  Avoids the (8,K)/(.,128) tile collapse by
    padding instead of shrinking the tile when `n` has no good divisor."""
    cap = max(mult, (cap // mult) * mult)
    n_al = _round_up(n, mult)
    if n_al <= cap:
        return n_al, n_al
    d = _largest_divisor(n_al, cap, mult)
    if 2 * d >= cap:                       # good divisor, no extra padding needed
        return d, n_al
    return cap, _round_up(n_al, cap)       # pad up to a multiple of the full cap


# ----------------------------------------------------------------------------- matmul + bias kernel
def _matmul_bias_kernel(x_ref, w_ref, b_ref, o_ref):
    o_ref[...] = (jnp.dot(x_ref[...], w_ref[...], preferred_element_type=jnp.float32)
                  + b_ref[...]).astype(o_ref.dtype)


def _matmul_bias(x, w, b, *, tn, out_dtype=jnp.float32, tm_cap=256):
    """y = x @ w + b, tiled over (M, N) with a parallel grid.  N % tn == 0 is required
    (caller pads N via _pick_tile); M is padded/sliced here if needed.  K is not tiled
    (E / H are modest for this model)."""
    M, K = x.shape
    K2, N = w.shape
    assert K == K2 and N % tn == 0
    tm, Mp = _pick_tile(M, tm_cap, 8)
    if Mp != M:
        x = jnp.pad(x, ((0, Mp - M), (0, 0)))
    y = pl.pallas_call(
        _matmul_bias_kernel,
        out_shape=jax.ShapeDtypeStruct((Mp, N), out_dtype),
        grid=(Mp // tm, N // tn),
        in_specs=[pl.BlockSpec((tm, K), lambda i, j: (i, 0)),
                  pl.BlockSpec((K, tn), lambda i, j: (0, j)),
                  pl.BlockSpec((1, tn), lambda i, j: (0, j))],
        out_specs=pl.BlockSpec((tm, tn), lambda i, j: (i, j)),
        compiler_params=pltpu.CompilerParams(
            dimension_semantics=("parallel", "parallel"),
            vmem_limit_bytes=_VMEM_LIMIT),
    )(x, w, b)
    return y[:M]


# ----------------------------------------------------------------------------- recurrence kernel
def _rnn_recurrence_kernel(xproj_ref,   # (Tt, Bt, Hp) bf16  pre-projected inputs (chunk of T)
                           h0_ref,      # (Bt, Hp)     f32   initial hidden state (this batch block)
                           whh_t_ref,   # (Hp, Hp)     bf16  W_hh^T
                           hs_ref,      # (Tt, Bt, Hp) bf16  hidden states out (chunk of T)
                           hN_ref,      # (Bt, Hp)     f32   final hidden state out
                           h_carry,     # VMEM (Bt,Hp) f32   carry across time chunks
                           *, t_chunk, t_real, unroll):
    # NOTE: the carry pattern relies on the time axis (grid axis 1) being "arbitrary"
    # (sequential) and on h0/hN/xproj/hs all being indexed by the batch block (axis 0).
    c = pl.program_id(1)                 # time-chunk index (innermost grid axis)

    @pl.when(c == 0)
    def _():
        h_carry[...] = h0_ref[...]

    whh = whh_t_ref[...]                 # hoisted: one VMEM load per chunk
    h_in = h_carry[...]
    base_t = c * t_chunk

    def step(t, h):
        # h_t = tanh(xproj_t + h_{t-1} @ W_hh^T); xproj already holds x@W_ih^T + b_ih + b_hh.
        pre = xproj_ref[t].astype(jnp.float32) + jnp.dot(
            h.astype(jnp.bfloat16), whh, preferred_element_type=jnp.float32)
        h_new = jnp.tanh(pre)
        hs_ref[t] = h_new.astype(hs_ref.dtype)
        # Freeze the carry on padded timesteps so hN is exactly h_T (extra hs rows are discarded).
        return jnp.where(base_t + t < t_real, h_new, h)

    h_out = lax.fori_loop(0, t_chunk, step, h_in, unroll=unroll)
    h_carry[...] = h_out
    hN_ref[...] = h_out


# ----------------------------------------------------------------------------- wrapper
@jax.jit
def rnn_lm_forward(x_ids, params, hidden=None):
    """x_ids: (B, T) int32 token ids. Returns (logits (B,T,V) f32, hidden (1,B,H) f32)."""
    emb_mat = params["embedding"]   # (V, E)
    w_ih = params["w_ih"]           # (H, E)
    w_hh = params["w_hh"]           # (H, H)
    b_ih = params["b_ih"]           # (H,)
    b_hh = params["b_hh"]           # (H,)
    w_fc = params["w_fc"]           # (V, H)
    b_fc = params["b_fc"]           # (V,)

    B, T = x_ids.shape
    V, E = emb_mat.shape
    H = w_hh.shape[0]

    if hidden is None:
        hidden = jnp.zeros((1, B, H), jnp.float32)

    # ---- tile-friendly padded sizes (zero padding provably leaves real entries unchanged)
    Bp = _round_up(B, 8)
    Ep = _round_up(E, 128)
    tn_h, Hp = _pick_tile(H, 512, 128)       # hidden-dim tile for stage 1 (and K of stages 2/3)
    tn_v, Vp = _pick_tile(V, 512, 128)       # vocab-dim tile for stage 3 (pads V if needed)

    # Batch blocking for the recurrence: 2 blocks lets v7x's 2nd TensorCore take half the batch.
    # Only split when the bf16 sublane tiling (16) still divides the block.
    Bt = Bp // 2 if (Bp % 32 == 0) else Bp

    # VMEM-budgeted time chunk: xproj + hs chunks are bf16 and double-buffered.
    per_t = 2 * (Bt * Hp * 2) + 2 * (Bt * Hp * 2)                      # xproj dbl-buf + hs dbl-buf
    fixed = 2 * (Hp * Hp * 2) + 2 * (Bt * Hp * 4) + 2 * (Bt * Hp * 4) + Bt * Hp * 4
    Tt = max(1, min(128, (_REC_VMEM_BUDGET - fixed) // per_t, _round_up(T, 8)))
    if Tt >= 8:
        Tt = (Tt // 8) * 8
    Tp = _round_up(T, Tt)                    # pad T so Tt always divides (no degenerate chunks)
    unroll = Tt if Tt <= 16 else 8

    # ---- embedding gather directly into the padded, bf16, time-major layout
    emb_pad = jnp.pad(emb_mat.astype(jnp.bfloat16), ((0, 0), (0, Ep - E)))       # (V, Ep) bf16
    ids_tm = jnp.pad(x_ids.T.astype(jnp.int32), ((0, Tp - T), (0, Bp - B)))      # (Tp, Bp), pad=token 0
    emb_tbe = jnp.take(emb_pad, ids_tm, axis=0)                                  # (Tp, Bp, Ep) bf16

    # ---- zero-padded bf16 weights, f32 biases
    wih_t = jnp.pad(w_ih.T.astype(jnp.bfloat16), ((0, Ep - E), (0, Hp - H)))     # (Ep, Hp)
    whh_t = jnp.pad(w_hh.T.astype(jnp.bfloat16), ((0, Hp - H), (0, Hp - H)))     # (Hp, Hp)
    b_fused = jnp.pad((b_ih + b_hh).astype(jnp.float32)[None, :], ((0, 0), (0, Hp - H)))
    wfc_t = jnp.pad(w_fc.T.astype(jnp.bfloat16), ((0, Hp - H), (0, Vp - V)))     # (Hp, Vp)
    b_fc_p = jnp.pad(b_fc.astype(jnp.float32)[None, :], ((0, 0), (0, Vp - V)))   # (1, Vp)
    h0 = jnp.pad(hidden[0].astype(jnp.float32), ((0, Bp - B), (0, Hp - H)))      # (Bp, Hp)

    # (1) Hoisted input projection over ALL timesteps (bf16 MXU, f32 acc, bf16 output).
    xproj = _matmul_bias(emb_tbe.reshape(Tp * Bp, Ep), wih_t, b_fused,
                         tn=tn_h, out_dtype=jnp.bfloat16)                        # (Tp*Bp, Hp)
    xproj = xproj.reshape(Tp, Bp, Hp)

    # (2) Serial recurrence: batch blocks "parallel", time chunks "arbitrary", f32 carry in VMEM.
    hs, h_final = pl.pallas_call(
        functools.partial(_rnn_recurrence_kernel, t_chunk=Tt, t_real=T, unroll=unroll),
        out_shape=(jax.ShapeDtypeStruct((Tp, Bp, Hp), jnp.bfloat16),
                   jax.ShapeDtypeStruct((Bp, Hp), jnp.float32)),
        grid=(Bp // Bt, Tp // Tt),
        in_specs=[pl.BlockSpec((Tt, Bt, Hp), lambda b, c: (c, b, 0)),
                  pl.BlockSpec((Bt, Hp), lambda b, c: (b, 0)),
                  pl.BlockSpec((Hp, Hp), lambda b, c: (0, 0))],
        out_specs=(pl.BlockSpec((Tt, Bt, Hp), lambda b, c: (c, b, 0)),
                   pl.BlockSpec((Bt, Hp), lambda b, c: (b, 0))),
        scratch_shapes=[pltpu.VMEM((Bt, Hp), jnp.float32)],
        compiler_params=pltpu.CompilerParams(
            dimension_semantics=("parallel", "arbitrary"),   # time axis MUST stay sequential
            vmem_limit_bytes=_VMEM_LIMIT),
    )(xproj, h0, whh_t)

    # (3) Output projection as a separate parallel tiled matmul (bf16 MXU, f32 logits).
    # Transpose the small H-sized bf16 tensor (not the V-sized logits) to batch-major.
    hs_bth = jnp.transpose(hs, (1, 0, 2)).reshape(Bp * Tp, Hp)                   # (Bp*Tp, Hp) bf16
    logits = _matmul_bias(hs_bth, wfc_t, b_fc_p, tn=tn_v, out_dtype=jnp.float32) # (Bp*Tp, Vp)
    logits = logits.reshape(Bp, Tp, Vp)[:B, :T, :V]                              # (B, T, V)

    return logits, h_final[:B, :H][None]                                         # hidden: (1, B, H)


# ----------------------------------------------------------------------------- reference
def rnn_lm_reference(x_ids, params, hidden=None, *, match_bf16=False):
    """Pure-JAX reference replicating nn.Embedding + nn.RNN(batch_first) + nn.Linear.
    With match_bf16=True it mirrors the kernel's bf16 matmul operands / f32 accumulation."""
    emb_mat = params["embedding"]
    w_ih, w_hh = params["w_ih"], params["w_hh"]
    b_ih, b_hh = params["b_ih"], params["b_hh"]
    w_fc, b_fc = params["w_fc"], params["b_fc"]
    B, T = x_ids.shape
    H = w_hh.shape[0]
    if hidden is None:
        hidden = jnp.zeros((1, B, H), jnp.float32)

    cd = jnp.bfloat16 if match_bf16 else jnp.float32
    emb = jnp.take(emb_mat.astype(cd), x_ids, axis=0)                      # (B, T, E)
    xproj = jnp.einsum("bte,he->bth", emb, w_ih.astype(cd),
                       preferred_element_type=jnp.float32) + (b_ih + b_hh)
    xproj = xproj.astype(cd)
    whh_c = w_hh.astype(cd)

    def step(h, xp_t):
        h_new = jnp.tanh(xp_t.astype(jnp.float32) +
                         jnp.dot(h.astype(cd), whh_c.T, preferred_element_type=jnp.float32))
        return h_new, h_new.astype(cd)

    h_final, hs = lax.scan(step, hidden[0].astype(jnp.float32),
                           jnp.transpose(xproj, (1, 0, 2)))
    out = jnp.transpose(hs, (1, 0, 2))                                     # (B, T, H)
    logits = jnp.einsum("bth,vh->btv", out, w_fc.astype(cd),
                        preferred_element_type=jnp.float32) + b_fc
    return logits, h_final[None]


# ----------------------------------------------------------------------------- params
def init_params(key, vocab_size, embedding_dim, hidden_dim):
    """Deterministic init matching PyTorch shapes; RNN/Linear use U(-1/sqrt(H), 1/sqrt(H))."""
    ks = jax.random.split(key, 7)
    bound = 1.0 / (hidden_dim ** 0.5)
    u = lambda k, shape: jax.random.uniform(k, shape, jnp.float32, -bound, bound)
    return {
        # "pre-trained GloVe" embedding matrix stand-in (frozen)
        "embedding": jax.random.normal(ks[0], (vocab_size, embedding_dim), jnp.float32),
        "w_ih": u(ks[1], (hidden_dim, embedding_dim)),
        "w_hh": u(ks[2], (hidden_dim, hidden_dim)),
        "b_ih": u(ks[3], (hidden_dim,)),
        "b_hh": u(ks[4], (hidden_dim,)),
        "w_fc": u(ks[5], (vocab_size, hidden_dim)),
        "b_fc": u(ks[6], (vocab_size,)),
    }


# ----------------------------------------------------------------------------- main
if __name__ == "__main__":
    VOCAB, EMB, HID = 64, 32, 32
    B, T = 2, 8

    key = jax.random.PRNGKey(0)
    k_params, k_ids = jax.random.split(key)
    params = init_params(k_params, VOCAB, EMB, HID)
    x_ids = jax.random.randint(k_ids, (B, T), 0, VOCAB, dtype=jnp.int32)

    logits, hidden = rnn_lm_forward(x_ids, params)
    logits = jax.block_until_ready(logits)
    hidden = jax.block_until_ready(hidden)

    assert logits.shape == (B, T, VOCAB), logits.shape
    assert hidden.shape == (1, B, HID), hidden.shape

    # (a) bf16-matched reference: same bf16 matmul operands / f32 accumulation as the kernel.
    ref_l, ref_h = rnn_lm_reference(x_ids, params, match_bf16=True)
    assert jnp.allclose(logits, ref_l, rtol=2e-2, atol=2e-2), "logits mismatch (bf16-matched ref)"
    assert jnp.allclose(hidden, ref_h, rtol=2e-2, atol=2e-2), "hidden mismatch (bf16-matched ref)"

    # (b) pure-f32 reference (PyTorch semantics); loose tolerance covers bf16 quantization.
    ref_l32, ref_h32 = rnn_lm_reference(x_ids, params, match_bf16=False)
    assert jnp.allclose(logits, ref_l32, rtol=2e-1, atol=2e-1), "logits mismatch (f32 ref)"
    assert jnp.allclose(hidden, ref_h32, rtol=2e-1, atol=2e-1), "hidden mismatch (f32 ref)"

    print("KERNEL_OK")
</pallas_src>

<mosaic_0001>
module attributes {stable_mosaic.version = 11 : i64} {
  func.func @_matmul_bias_kernel(%arg0: i32, %arg1: i32, %arg2: memref<64x128xbf16, #tpu.memory_space<vmem>>, %arg3: memref<128x128xbf16, #tpu.memory_space<vmem>>, %arg4: memref<1x128xf32, #tpu.memory_space<vmem>>, %arg5: memref<64x128xbf16, #tpu.memory_space<vmem>>) attributes {dimension_semantics = [#tpu.dimension_semantics<parallel>, #tpu.dimension_semantics<parallel>], iteration_bounds = array<i64: 1, 1>, scalar_prefetch = 0 : i64, scratch_operands = 0 : i64, tpu.core_type = #tpu.core_type<tc>, window_params = [{transform_indices = @transform_0, window_bounds = array<i64: 64, 128>}, {transform_indices = @transform_1, window_bounds = array<i64: 128, 128>}, {transform_indices = @transform_2, window_bounds = array<i64: 1, 128>}, {transform_indices = @transform_3, window_bounds = array<i64: 64, 128>}]} {
    %c0 = arith.constant 0 : index
    %c0_0 = arith.constant 0 : index
    %0 = vector.load %arg2[%c0, %c0_0] : memref<64x128xbf16, #tpu.memory_space<vmem>>, vector<64x128xbf16>
    %c0_1 = arith.constant 0 : index
    %c0_2 = arith.constant 0 : index
    %1 = vector.load %arg3[%c0_1, %c0_2] : memref<128x128xbf16, #tpu.memory_space<vmem>>, vector<128x128xbf16>
    %cst = arith.constant dense<0.000000e+00> : vector<64x128xf32>
    %2 = tpu.matmul %0, %1, %cst {dimension_numbers = #tpu.dot_dimension_numbers<[1], [0], [0], [1], [0, 0, 1, 1], [], []>} : vector<64x128xbf16>, vector<128x128xbf16>, vector<64x128xf32> -> vector<64x128xf32>
    %c0_3 = arith.constant 0 : index
    %c0_4 = arith.constant 0 : index
    %3 = vector.load %arg4[%c0_3, %c0_4] : memref<1x128xf32, #tpu.memory_space<vmem>>, vector<1x128xf32>
    %4 = vector.broadcast %3 : vector<1x128xf32> to vector<64x128xf32>
    %5 = arith.addf %2, %4 : vector<64x128xf32>
    %6 = arith.truncf %5 : vector<64x128xf32> to vector<64x128xbf16>
    %c0_5 = arith.constant 0 : index
    %c0_6 = arith.constant 0 : index
    %7 = vector.load %arg5[%c0_5, %c0_6] : memref<64x128xbf16, #tpu.memory_space<vmem>>, vector<64x128xbf16>
    tpu.vector_store %arg5[%c0_5, %c0_6], %6 {strides = array<i32>} : memref<64x128xbf16, #tpu.memory_space<vmem>>, vector<64x128xbf16>,
    return
  }
  func.func @transform_0(%arg0: i32, %arg1: i32) -> (i32, i32) {
    %c0_i32 = arith.constant 0 : i32
    %c0_i32_0 = arith.constant 0 : i32
    return %arg0, %c0_i32 : i32, i32
  }
  func.func @transform_1(%arg0: i32, %arg1: i32) -> (i32, i32) {
    %c0_i32 = arith.constant 0 : i32
    %c0_i32_0 = arith.constant 0 : i32
    return %c0_i32, %arg1 : i32, i32
  }
  func.func @transform_2(%arg0: i32, %arg1: i32) -> (i32, i32) {
    %c0_i32 = arith.constant 0 : i32
    %c0_i32_0 = arith.constant 0 : i32
    return %c0_i32, %arg1 : i32, i32
  }
  func.func @transform_3(%arg0: i32, %arg1: i32) -> (i32, i32) {
    %c0_i32 = arith.constant 0 : i32
    return %arg0, %arg1 : i32, i32
  }
}

module attributes {stable_mosaic.version = 11 : i64} {
  func.func @_rnn_recurrence_kernel(%arg0: i32, %arg1: i32, %arg2: memref<8x8x128xbf16, #tpu.memory_space<vmem>>, %arg3: memref<8x128xf32, #tpu.memory_space<vmem>>, %arg4: memref<128x128xbf16, #tpu.memory_space<vmem>>, %arg5: memref<8x8x128xbf16, #tpu.memory_space<vmem>>, %arg6: memref<8x128xf32, #tpu.memory_space<vmem>>, %arg7: memref<8x128xf32, #tpu.memory_space<vmem>>) attributes {dimension_semantics = [#tpu.dimension_semantics<parallel>, #tpu.dimension_semantics<arbitrary>], iteration_bounds = array<i64: 1, 1>, scalar_prefetch = 0 : i64, scratch_operands = 1 : i64, tpu.core_type = #tpu.core_type<tc>, window_params = [{transform_indices = @transform_0, window_bounds = array<i64: 8, 8, 128>}, {transform_indices = @transform_1, window_bounds = array<i64: 8, 128>}, {pipeline_mode = #tpu.pipeline_mode<synchronous>, transform_indices = @transform_2, window_bounds = array<i64: 128, 128>}, {transform_indices = @transform_3, window_bounds = array<i64: 8, 8, 128>}, {transform_indices = @transform_4, window_bounds = array<i64: 8, 128>}]} {
    %c0_i32 = arith.constant 0 : i32
    %0 = arith.cmpi eq, %arg1, %c0_i32 : i32
    %1 = arith.extui %0 : i1 to i32
    %c0_i32_0 = arith.constant 0 : i32
    %2 = arith.cmpi ne, %1, %c0_i32_0 : i32
    scf.if %2 {
      %c0_57 = arith.constant 0 : index
      %c0_58 = arith.constant 0 : index
      %136 = vector.load %arg3[%c0_57, %c0_58] : memref<8x128xf32, #tpu.memory_space<vmem>>, vector<8x128xf32>
      %c0_59 = arith.constant 0 : index
      %c0_60 = arith.constant 0 : index
      %137 = vector.load %arg7[%c0_59, %c0_60] : memref<8x128xf32, #tpu.memory_space<vmem>>, vector<8x128xf32>
      tpu.vector_store %arg7[%c0_59, %c0_60], %136 {strides = array<i32>} : memref<8x128xf32, #tpu.memory_space<vmem>>, vector<8x128xf32>,
    } else {
    }
    %c0 = arith.constant 0 : index
    %c0_1 = arith.constant 0 : index
    %3 = vector.load %arg4[%c0, %c0_1] : memref<128x128xbf16, #tpu.memory_space<vmem>>, vector<128x128xbf16>
    %c0_2 = arith.constant 0 : index
    %c0_3 = arith.constant 0 : index
    %4 = vector.load %arg7[%c0_2, %c0_3] : memref<8x128xf32, #tpu.memory_space<vmem>>, vector<8x128xf32>
    %c8_i32 = arith.constant 8 : i32
    %5 = arith.muli %arg1, %c8_i32 : i32
    %c0_i32_4 = arith.constant 0 : i32
    %6 = arith.index_cast %c0_i32_4 : i32 to index
    %c0_5 = arith.constant 0 : index
    %c0_6 = arith.constant 0 : index
    %7 = vector.load %arg2[%6, %c0_5, %c0_6] : memref<8x8x128xbf16, #tpu.memory_space<vmem>>, vector<1x8x128xbf16>
    %8 = vector.shape_cast %7 : vector<1x8x128xbf16> to vector<8x128xbf16>
    %9 = arith.extf %8 : vector<8x128xbf16> to vector<8x128xf32>
    %10 = arith.truncf %4 : vector<8x128xf32> to vector<8x128xbf16>
    %cst = arith.constant dense<0.000000e+00> : vector<8x128xf32>
    %11 = tpu.matmul %10, %3, %cst {dimension_numbers = #tpu.dot_dimension_numbers<[1], [0], [0], [1], [0, 0, 1, 1], [], []>} : vector<8x128xbf16>, vector<128x128xbf16>, vector<8x128xf32> -> vector<8x128xf32>
    %12 = arith.addf %9, %11 : vector<8x128xf32>
    %13 = math.tanh %12 : vector<8x128xf32>
    %14 = arith.truncf %13 : vector<8x128xf32> to vector<8x128xbf16>
    %15 = arith.index_cast %c0_i32_4 : i32 to index
    %c0_7 = arith.constant 0 : index
    %c0_8 = arith.constant 0 : index
    %16 = vector.load %arg5[%15, %c0_7, %c0_8] : memref<8x8x128xbf16, #tpu.memory_space<vmem>>, vector<1x8x128xbf16>
    %17 = vector.shape_cast %16 : vector<1x8x128xbf16> to vector<8x128xbf16>
    %18 = vector.shape_cast %14 : vector<8x128xbf16> to vector<1x8x128xbf16>
    tpu.vector_store %arg5[%15, %c0_7, %c0_8], %18 {strides = array<i32>} : memref<8x8x128xbf16, #tpu.memory_space<vmem>>, vector<1x8x128xbf16>,
    %19 = arith.addi %5, %c0_i32_4 : i32
    %c8_i32_9 = arith.constant 8 : i32
    %20 = arith.cmpi slt, %19, %c8_i32_9 : i32
    %21 = arith.select %20, %13, %4 : vector<8x128xf32>
    %c1_i32 = arith.constant 1 : i32
    %22 = arith.index_cast %c1_i32 : i32 to index
    %c0_10 = arith.constant 0 : index
    %c0_11 = arith.constant 0 : index
    %23 = vector.load %arg2[%22, %c0_10, %c0_11] : memref<8x8x128xbf16, #tpu.memory_space<vmem>>, vector<1x8x128xbf16>
    %24 = vector.shape_cast %23 : vector<1x8x128xbf16> to vector<8x128xbf16>
    %25 = arith.extf %24 : vector<8x128xbf16> to vector<8x128xf32>
    %26 = arith.truncf %21 : vector<8x128xf32> to vector<8x128xbf16>
    %cst_12 = arith.constant dense<0.000000e+00> : vector<8x128xf32>
    %27 = tpu.matmul %26, %3, %cst_12 {dimension_numbers = #tpu.dot_dimension_numbers<[1], [0], [0], [1], [0, 0, 1, 1], [], []>} : vector<8x128xbf16>, vector<128x128xbf16>, vector<8x128xf32> -> vector<8x128xf32>
    %28 = arith.addf %25, %27 : vector<8x128xf32>
    %29 = math.tanh %28 : vector<8x128xf32>
    %30 = arith.truncf %29 : vector<8x128xf32> to vector<8x128xbf16>
    %31 = arith.index_cast %c1_i32 : i32 to index
    %c0_13 = arith.constant 0 : index
    %c0_14 = arith.constant 0 : index
    %32 = vector.load %arg5[%31, %c0_13, %c0_14] : memref<8x8x128xbf16, #tpu.memory_space<vmem>>, vector<1x8x128xbf16>
    %33 = vector.shape_cast %32 : vector<1x8x128xbf16> to vector<8x128xbf16>
    %34 = vector.shape_cast %30 : vector<8x128xbf16> to vector<1x8x128xbf16>
    tpu.vector_store %arg5[%31, %c0_13, %c0_14], %34 {strides = array<i32>} : memref<8x8x128xbf16, #tpu.memory_space<vmem>>, vector<1x8x128xbf16>,
    %35 = arith.addi %5, %c1_i32 : i32
    %c8_i32_15 = arith.constant 8 : i32
    %36 = arith.cmpi slt, %35, %c8_i32_15 : i32
    %37 = arith.select %36, %29, %21 : vector<8x128xf32>
    %c2_i32 = arith.constant 2 : i32
    %38 = arith.index_cast %c2_i32 : i32 to index
    %c0_16 = arith.constant 0 : index
    %c0_17 = arith.constant 0 : index
    %39 = vector.load %arg2[%38, %c0_16, %c0_17] : memref<8x8x128xbf16, #tpu.memory_space<vmem>>, vector<1x8x128xbf16>
    %40 = vector.shape_cast %39 : vector<1x8x128xbf16> to vector<8x128xbf16>
    %41 = arith.extf %40 : vector<8x128xbf16> to vector<8x128xf32>
    %42 = arith.truncf %37 : vector<8x128xf32> to vector<8x128xbf16>
    %cst_18 = arith.constant dense<0.000000e+00> : vector<8x128xf32>
    %43 = tpu.matmul %42, %3, %cst_18 {dimension_numbers = #tpu.dot_dimension_numbers<[1], [0], [0], [1], [0, 0, 1, 1], [], []>} : vector<8x128xbf16>, vector<128x128xbf16>, vector<8x128xf32> -> vector<8x128xf32>
    %44 = arith.addf %41, %43 : vector<8x128xf32>
    %45 = math.tanh %44 : vector<8x128xf32>
    %46 = arith.truncf %45 : vector<8x128xf32> to vector<8x128xbf16>
    %47 = arith.index_cast %c2_i32 : i32 to index
    %c0_19 = arith.constant 0 : index
    %c0_20 = arith.constant 0 : index
    %48 = vector.load %arg5[%47, %c0_19, %c0_20] : memref<8x8x128xbf16, #tpu.memory_space<vmem>>, vector<1x8x128xbf16>
    %49 = vector.shape_cast %48 : vector<1x8x128xbf16> to vector<8x128xbf16>
    %50 = vector.shape_cast %46 : vector<8x128xbf16> to vector<1x8x128xbf16>
    tpu.vector_store %arg5[%47, %c0_19, %c0_20], %50 {strides = array<i32>} : memref<8x8x128xbf16, #tpu.memory_space<vmem>>, vector<1x8x128xbf16>,
    %51 = arith.addi %5, %c2_i32 : i32
    %c8_i32_21 = arith.constant 8 : i32
    %52 = arith.cmpi slt, %51, %c8_i32_21 : i32
    %53 = arith.select %52, %45, %37 : vector<8x128xf32>
    %c3_i32 = arith.constant 3 : i32
    %54 = arith.index_cast %c3_i32 : i32 to index
    %c0_22 = arith.constant 0 : index
    %c0_23 = arith.constant 0 : index
    %55 = vector.load %arg2[%54, %c0_22, %c0_23] : memref<8x8x128xbf16, #tpu.memory_space<vmem>>, vector<1x8x128xbf16>
    %56 = vector.shape_cast %55 : vector<1x8x128xbf16> to vector<8x128xbf16>
    %57 = arith.extf %56 : vector<8x128xbf16> to vector<8x128xf32>
    %58 = arith.truncf %53 : vector<8x128xf32> to vector<8x128xbf16>
    %cst_24 = arith.constant dense<0.000000e+00> : vector<8x128xf32>
    %59 = tpu.matmul %58, %3, %cst_24 {dimension_numbers = #tpu.dot_dimension_numbers<[1], [0], [0], [1], [0, 0, 1, 1], [], []>} : vector<8x128xbf16>, vector<128x128xbf16>, vector<8x128xf32> -> vector<8x128xf32>
    %60 = arith.addf %57, %59 : vector<8x128xf32>
    %61 = math.tanh %60 : vector<8x128xf32>
    %62 = arith.truncf %61 : vector<8x128xf32> to vector<8x128xbf16>
    %63 = arith.index_cast %c3_i32 : i32 to index
    %c0_25 = arith.constant 0 : index
    %c0_26 = arith.constant 0 : index
    %64 = vector.load %arg5[%63, %c0_25, %c0_26] : memref<8x8x128xbf16, #tpu.memory_space<vmem>>, vector<1x8x128xbf16>
    %65 = vector.shape_cast %64 : vector<1x8x128xbf16> to vector<8x128xbf16>
    %66 = vector.shape_cast %62 : vector<8x128xbf16> to vector<1x8x128xbf16>
    tpu.vector_store %arg5[%63, %c0_25, %c0_26], %66 {strides = array<i32>} : memref<8x8x128xbf16, #tpu.memory_space<vmem>>, vector<1x8x128xbf16>,
    %67 = arith.addi %5, %c3_i32 : i32
    %c8_i32_27 = arith.constant 8 : i32
    %68 = arith.cmpi slt, %67, %c8_i32_27 : i32
    %69 = arith.select %68, %61, %53 : vector<8x128xf32>
    %c4_i32 = arith.constant 4 : i32
    %70 = arith.index_cast %c4_i32 : i32 to index
    %c0_28 = arith.constant 0 : index
    %c0_29 = arith.constant 0 : index
    %71 = vector.load %arg2[%70, %c0_28, %c0_29] : memref<8x8x128xbf16, #tpu.memory_space<vmem>>, vector<1x8x128xbf16>
    %72 = vector.shape_cast %71 : vector<1x8x128xbf16> to vector<8x128xbf16>
    %73 = arith.extf %72 : vector<8x128xbf16> to vector<8x128xf32>
    %74 = arith.truncf %69 : vector<8x128xf32> to vector<8x128xbf16>
    %cst_30 = arith.constant dense<0.000000e+00> : vector<8x128xf32>
    %75 = tpu.matmul %74, %3, %cst_30 {dimension_numbers = #tpu.dot_dimension_numbers<[1], [0], [0], [1], [0, 0, 1, 1], [], []>} : vector<8x128xbf16>, vector<128x128xbf16>, vector<8x128xf32> -> vector<8x128xf32>
    %76 = arith.addf %73, %75 : vector<8x128xf32>
    %77 = math.tanh %76 : vector<8x128xf32>
    %78 = arith.truncf %77 : vector<8x128xf32> to vector<8x128xbf16>
    %79 = arith.index_cast %c4_i32 : i32 to index
    %c0_31 = arith.constant 0 : index
    %c0_32 = arith.constant 0 : index
    %80 = vector.load %arg5[%79, %c0_31, %c0_32] : memref<8x8x128xbf16, #tpu.memory_space<vmem>>, vector<1x8x128xbf16>
    %81 = vector.shape_cast %80 : vector<1x8x128xbf16> to vector<8x128xbf16>
    %82 = vector.shape_cast %78 : vector<8x128xbf16> to vector<1x8x128xbf16>
    tpu.vector_store %arg5[%79, %c0_31, %c0_32], %82 {strides = array<i32>} : memref<8x8x128xbf16, #tpu.memory_space<vmem>>, vector<1x8x128xbf16>,
    %83 = arith.addi %5, %c4_i32 : i32
    %c8_i32_33 = arith.constant 8 : i32
    %84 = arith.cmpi slt, %83, %c8_i32_33 : i32
    %85 = arith.select %84, %77, %69 : vector<8x128xf32>
    %c5_i32 = arith.constant 5 : i32
    %86 = arith.index_cast %c5_i32 : i32 to index
    %c0_34 = arith.constant 0 : index
    %c0_35 = arith.constant 0 : index
    %87 = vector.load %arg2[%86, %c0_34, %c0_35] : memref<8x8x128xbf16, #tpu.memory_space<vmem>>, vector<1x8x128xbf16>
    %88 = vector.shape_cast %87 : vector<1x8x128xbf16> to vector<8x128xbf16>
    %89 = arith.extf %88 : vector<8x128xbf16> to vector<8x128xf32>
    %90 = arith.truncf %85 : vector<8x128xf32> to vector<8x128xbf16>
    %cst_36 = arith.constant dense<0.000000e+00> : vector<8x128xf32>
    %91 = tpu.matmul %90, %3, %cst_36 {dimension_numbers = #tpu.dot_dimension_numbers<[1], [0], [0], [1], [0, 0, 1, 1], [], []>} : vector<8x128xbf16>, vector<128x128xbf16>, vector<8x128xf32> -> vector<8x128xf32>
    %92 = arith.addf %89, %91 : vector<8x128xf32>
    %93 = math.tanh %92 : vector<8x128xf32>
    %94 = arith.truncf %93 : vector<8x128xf32> to vector<8x128xbf16>
    %95 = arith.index_cast %c5_i32 : i32 to index
    %c0_37 = arith.constant 0 : index
    %c0_38 = arith.constant 0 : index
    %96 = vector.load %arg5[%95, %c0_37, %c0_38] : memref<8x8x128xbf16, #tpu.memory_space<vmem>>, vector<1x8x128xbf16>
    %97 = vector.shape_cast %96 : vector<1x8x128xbf16> to vector<8x128xbf16>
    %98 = vector.shape_cast %94 : vector<8x128xbf16> to vector<1x8x128xbf16>
    tpu.vector_store %arg5[%95, %c0_37, %c0_38], %98 {strides = array<i32>} : memref<8x8x128xbf16, #tpu.memory_space<vmem>>, vector<1x8x128xbf16>,
    %99 = arith.addi %5, %c5_i32 : i32
    %c8_i32_39 = arith.constant 8 : i32
    %100 = arith.cmpi slt, %99, %c8_i32_39 : i32
    %101 = arith.select %100, %93, %85 : vector<8x128xf32>
    %c6_i32 = arith.constant 6 : i32
    %102 = arith.index_cast %c6_i32 : i32 to index
    %c0_40 = arith.constant 0 : index
    %c0_41 = arith.constant 0 : index
    %103 = vector.load %arg2[%102, %c0_40, %c0_41] : memref<8x8x128xbf16, #tpu.memory_space<vmem>>, vector<1x8x128xbf16>
    %104 = vector.shape_cast %103 : vector<1x8x128xbf16> to vector<8x128xbf16>
    %105 = arith.extf %104 : vector<8x128xbf16> to vector<8x128xf32>
    %106 = arith.truncf %101 : vector<8x128xf32> to vector<8x128xbf16>
    %cst_42 = arith.constant dense<0.000000e+00> : vector<8x128xf32>
    %107 = tpu.matmul %106, %3, %cst_42 {dimension_numbers = #tpu.dot_dimension_numbers<[1], [0], [0], [1], [0, 0, 1, 1], [], []>} : vector<8x128xbf16>, vector<128x128xbf16>, vector<8x128xf32> -> vector<8x128xf32>
    %108 = arith.addf %105, %107 : vector<8x128xf32>
    %109 = math.tanh %108 : vector<8x128xf32>
    %110 = arith.truncf %109 : vector<8x128xf32> to vector<8x128xbf16>
    %111 = arith.index_cast %c6_i32 : i32 to index
    %c0_43 = arith.constant 0 : index
    %c0_44 = arith.constant 0 : index
    %112 = vector.load %arg5[%111, %c0_43, %c0_44] : memref<8x8x128xbf16, #tpu.memory_space<vmem>>, vector<1x8x128xbf16>
    %113 = vector.shape_cast %112 : vector<1x8x128xbf16> to vector<8x128xbf16>
    %114 = vector.shape_cast %110 : vector<8x128xbf16> to vector<1x8x128xbf16>
    tpu.vector_store %arg5[%111, %c0_43, %c0_44], %114 {strides = array<i32>} : memref<8x8x128xbf16, #tpu.memory_space<vmem>>, vector<1x8x128xbf16>,
    %115 = arith.addi %5, %c6_i32 : i32
    %c8_i32_45 = arith.constant 8 : i32
    %116 = arith.cmpi slt, %115, %c8_i32_45 : i32
    %117 = arith.select %116, %109, %101 : vector<8x128xf32>
    %c7_i32 = arith.constant 7 : i32
    %118 = arith.index_cast %c7_i32 : i32 to index
    %c0_46 = arith.constant 0 : index
    %c0_47 = arith.constant 0 : index
    %119 = vector.load %arg2[%118, %c0_46, %c0_47] : memref<8x8x128xbf16, #tpu.memory_space<vmem>>, vector<1x8x128xbf16>
    %120 = vector.shape_cast %119 : vector<1x8x128xbf16> to vector<8x128xbf16>
    %121 = arith.extf %120 : vector<8x128xbf16> to vector<8x128xf32>
    %122 = arith.truncf %117 : vector<8x128xf32> to vector<8x128xbf16>
    %cst_48 = arith.constant dense<0.000000e+00> : vector<8x128xf32>
    %123 = tpu.matmul %122, %3, %cst_48 {dimension_numbers = #tpu.dot_dimension_numbers<[1], [0], [0], [1], [0, 0, 1, 1], [], []>} : vector<8x128xbf16>, vector<128x128xbf16>, vector<8x128xf32> -> vector<8x128xf32>
    %124 = arith.addf %121, %123 : vector<8x128xf32>
    %125 = math.tanh %124 : vector<8x128xf32>
    %126 = arith.truncf %125 : vector<8x128xf32> to vector<8x128xbf16>
    %127 = arith.index_cast %c7_i32 : i32 to index
    %c0_49 = arith.constant 0 : index
    %c0_50 = arith.constant 0 : index
    %128 = vector.load %arg5[%127, %c0_49, %c0_50] : memref<8x8x128xbf16, #tpu.memory_space<vmem>>, vector<1x8x128xbf16>
    %129 = vector.shape_cast %128 : vector<1x8x128xbf16> to vector<8x128xbf16>
    %130 = vector.shape_cast %126 : vector<8x128xbf16> to vector<1x8x128xbf16>
    tpu.vector_store %arg5[%127, %c0_49, %c0_50], %130 {strides = array<i32>} : memref<8x8x128xbf16, #tpu.memory_space<vmem>>, vector<1x8x128xbf16>,
    %131 = arith.addi %5, %c7_i32 : i32
    %c8_i32_51 = arith.constant 8 : i32
    %132 = arith.cmpi slt, %131, %c8_i32_51 : i32
    %133 = arith.select %132, %125, %117 : vector<8x128xf32>
    %c8_i32_52 = arith.constant 8 : i32
    %c0_53 = arith.constant 0 : index
    %c0_54 = arith.constant 0 : index
    %134 = vector.load %arg7[%c0_53, %c0_54] : memref<8x128xf32, #tpu.memory_space<vmem>>, vector<8x128xf32>
    tpu.vector_store %arg7[%c0_53, %c0_54], %133 {strides = array<i32>} : memref<8x128xf32, #tpu.memory_space<vmem>>, vector<8x128xf32>,
    %c0_55 = arith.constant 0 : index
    %c0_56 = arith.constant 0 : index
    %135 = vector.load %arg6[%c0_55, %c0_56] : memref<8x128xf32, #tpu.memory_space<vmem>>, vector<8x128xf32>
    tpu.vector_store %arg6[%c0_55, %c0_56], %133 {strides = array<i32>} : memref<8x128xf32, #tpu.memory_space<vmem>>, vector<8x128xf32>,
    return
  }
  func.func @transform_0(%arg0: i32, %arg1: i32) -> (i32, i32, i32) {
    %c0_i32 = arith.constant 0 : i32
    %c0_i32_0 = arith.constant 0 : i32
    return %arg1, %arg0, %c0_i32 : i32, i32, i32
  }
  func.func @transform_1(%arg0: i32, %arg1: i32) -> (i32, i32) {
    %c0_i32 = arith.constant 0 : i32
    %c0_i32_0 = arith.constant 0 : i32
    return %arg0, %c0_i32 : i32, i32
  }
  func.func @transform_2(%arg0: i32, %arg1: i32) -> (i32, i32) {
    %c0_i32 = arith.constant 0 : i32
    %c0_i32_0 = arith.constant 0 : i32
    %c0_i32_1 = arith.constant 0 : i32
    return %c0_i32, %c0_i32_0 : i32, i32
  }
  func.func @transform_3(%arg0: i32, %arg1: i32) -> (i32, i32, i32) {
    %c0_i32 = arith.constant 0 : i32
    %c0_i32_0 = arith.constant 0 : i32
    return %arg1, %arg0, %c0_i32 : i32, i32, i32
  }
  func.func @transform_4(%arg0: i32, %arg1: i32) -> (i32, i32) {
    %c0_i32 = arith.constant 0 : i32
    %c0_i32_0 = arith.constant 0 : i32
    return %arg0, %c0_i32 : i32, i32
  }
}

module attributes {stable_mosaic.version = 11 : i64} {
  func.func @_matmul_bias_kernel(%arg0: i32, %arg1: i32, %arg2: memref<64x128xbf16, #tpu.memory_space<vmem>>, %arg3: memref<128x128xbf16, #tpu.memory_space<vmem>>, %arg4: memref<1x128xf32, #tpu.memory_space<vmem>>, %arg5: memref<64x128xf32, #tpu.memory_space<vmem>>) attributes {dimension_semantics = [#tpu.dimension_semantics<parallel>, #tpu.dimension_semantics<parallel>], iteration_bounds = array<i64: 1, 1>, scalar_prefetch = 0 : i64, scratch_operands = 0 : i64, tpu.core_type = #tpu.core_type<tc>, window_params = [{transform_indices = @transform_0, window_bounds = array<i64: 64, 128>}, {transform_indices = @transform_1, window_bounds = array<i64: 128, 128>}, {transform_indices = @transform_2, window_bounds = array<i64: 1, 128>}, {transform_indices = @transform_3, window_bounds = array<i64: 64, 128>}]} {
    %c0 = arith.constant 0 : index
    %c0_0 = arith.constant 0 : index
    %0 = vector.load %arg2[%c0, %c0_0] : memref<64x128xbf16, #tpu.memory_space<vmem>>, vector<64x128xbf16>
    %c0_1 = arith.constant 0 : index
    %c0_2 = arith.constant 0 : index
    %1 = vector.load %arg3[%c0_1, %c0_2] : memref<128x128xbf16, #tpu.memory_space<vmem>>, vector<128x128xbf16>
    %cst = arith.constant dense<0.000000e+00> : vector<64x128xf32>
    %2 = tpu.matmul %0, %1, %cst {dimension_numbers = #tpu.dot_dimension_numbers<[1], [0], [0], [1], [0, 0, 1, 1], [], []>} : vector<64x128xbf16>, vector<128x128xbf16>, vector<64x128xf32> -> vector<64x128xf32>
    %c0_3 = arith.constant 0 : index
    %c0_4 = arith.constant 0 : index
    %3 = vector.load %arg4[%c0_3, %c0_4] : memref<1x128xf32, #tpu.memory_space<vmem>>, vector<1x128xf32>
    %4 = vector.broadcast %3 : vector<1x128xf32> to vector<64x128xf32>
    %5 = arith.addf %2, %4 : vector<64x128xf32>
    %c0_5 = arith.constant 0 : index
    %c0_6 = arith.constant 0 : index
    %6 = vector.load %arg5[%c0_5, %c0_6] : memref<64x128xf32, #tpu.memory_space<vmem>>, vector<64x128xf32>
    tpu.vector_store %arg5[%c0_5, %c0_6], %5 {strides = array<i32>} : memref<64x128xf32, #tpu.memory_space<vmem>>, vector<64x128xf32>,
    return
  }
  func.func @transform_0(%arg0: i32, %arg1: i32) -> (i32, i32) {
    %c0_i32 = arith.constant 0 : i32
    %c0_i32_0 = arith.constant 0 : i32
    return %arg0, %c0_i32 : i32, i32
  }
  func.func @transform_1(%arg0: i32, %arg1: i32) -> (i32, i32) {
    %c0_i32 = arith.constant 0 : i32
    %c0_i32_0 = arith.constant 0 : i32
    return %c0_i32, %arg1 : i32, i32
  }
  func.func @transform_2(%arg0: i32, %arg1: i32) -> (i32, i32) {
    %c0_i32 = arith.constant 0 : i32
    %c0_i32_0 = arith.constant 0 : i32
    return %c0_i32, %arg1 : i32, i32
  }
  func.func @transform_3(%arg0: i32, %arg1: i32) -> (i32, i32) {
    %c0_i32 = arith.constant 0 : i32
    return %arg0, %arg1 : i32, i32
  }
}

</mosaic_0001>

<llo_original>
// kernel: squeeze.1
$region0: #{squeeze.1}
  #allocation0 [shape = 's32[1]{0}', space=sflag, size = 0x4, scoped, tag = 'scoped memory for squeeze.1']
  %s0 = inlined_call_operand.<no memory space> [shape: f32[], index: 0, kind: input, shape index: {}]
  %s1 = inlined_call_operand.vmem [shape: f32[2,32], index: 1, kind: output, shape index: {}]
  %v2 = vstv %s0
  %3 = vst [vmem:[%s1] sm:$0x3] %v2

// kernel: rnn_lm_forward.3
$region0: #{rnn_lm_forward.3}
  #allocation0 [shape = 'u32[]', space=smem, size = 0x4, offset = 0x4, fixed_abs, tag = 'smem constant byte address 0x4 - core index']
  #allocation1 [shape = 'u32[144,128]{1,0:T(1,128)}', space=vmem, size = 0x12000, scoped, tag = 'internal scratch']
  %s0 = inlined_call_operand.vmem [shape: bf16[64,128], index: 0, kind: input, shape index: {}]
  %s1 = inlined_call_operand.vmem [shape: bf16[128,128], index: 1, kind: input, shape index: {}]
  %s2 = inlined_call_operand.vmem [shape: f32[1,128], index: 2, kind: input, shape index: {}]
  %s3 = inlined_call_operand.vmem [shape: bf16[64,128], index: 3, kind: output, shape index: {}]
  %s4 = sld [smem:[#allocation0]]
  $region22: #{rnn_lm_forward.3} parent=0
    _
  %s6 = ssub.s32 1, %s4
  %s7 = scalar_select 0, %s6, %s4
  // Predicated region
  $region2: #{rnn_lm_forward.3} parent=0 // pred_check
    _
  $region3: #{rnn_lm_forward.3} parent=0 // pred_check_branch
    %9 = sbr.rel (0) target = $region5
  $region4: #{rnn_lm_forward.3} parent=0 // pred_region
    _
  $region5: #{rnn_lm_forward.3} parent=0 // pred_fallthru
    _
  // Predicated region
  $region6: #{rnn_lm_forward.3} parent=0 // pred_check
    _
  $region7: #{rnn_lm_forward.3} parent=0 // pred_check_branch
    %11 = sbr.rel (0) target = $region9
  $region8: #{rnn_lm_forward.3} parent=0 // pred_region
    _
  $region9: #{rnn_lm_forward.3} parent=0 // pred_fallthru
    _
  // Predicated region
  $region10: #{rnn_lm_forward.3} parent=0 // pred_check
    _
  $region11: #{rnn_lm_forward.3} parent=0 // pred_check_branch
    %13 = sbr.rel (0) target = $region13
  $region12: #{rnn_lm_forward.3} parent=0 // pred_region
    _
  $region13: #{rnn_lm_forward.3} parent=0 // pred_fallthru
    _
  %v15 = vld [vmem:[%s0] sm:$0xf]
  %v16 = vld [vmem:[%s0 + $0x4] sm:$0xf]
  %v17 = vld [vmem:[%s0 + $0x8] sm:$0xf]
  %v18 = vld [vmem:[%s0 + $0xc] sm:$0xf]
  %v19 = vld [vmem:[%s0 + $0x10] sm:$0xf]
  %v20 = vld [vmem:[%s0 + $0x14] sm:$0xf]
  %v21 = vld [vmem:[%s0 + $0x18] sm:$0xf]
  %v22 = vld [vmem:[%s0 + $0x1c] sm:$0xf]
  %v23 = vld [vmem:[%s1] sm:$0xf]
  %v24 = vld [vmem:[%s1 + $0x4] sm:$0xf]
  %v25 = vld [vmem:[%s1 + $0x8] sm:$0xf]
  %v26 = vld [vmem:[%s1 + $0xc] sm:$0xf]
  %v27 = vld [vmem:[%s1 + $0x10] sm:$0xf]
  %v28 = vld [vmem:[%s1 + $0x14] sm:$0xf]
  %v29 = vld [vmem:[%s1 + $0x18] sm:$0xf]
  %v30 = vld [vmem:[%s1 + $0x1c] sm:$0xf]
  %v31 = vld [vmem:[%s1 + $0x20] sm:$0xf]
  %v32 = vld [vmem:[%s1 + $0x24] sm:$0xf]
  %v33 = vld [vmem:[%s1 + $0x28] sm:$0xf]
  %v34 = vld [vmem:[%s1 + $0x2c] sm:$0xf]
  %v35 = vld [vmem:[%s1 + $0x30] sm:$0xf]
  %v36 = vld [vmem:[%s1 + $0x34] sm:$0xf]
  %v37 = vld [vmem:[%s1 + $0x38] sm:$0xf]
  %v38 = vld [vmem:[%s1 + $0x3c] sm:$0xf]
  %v39 = vld [vmem:[%s2] sm:$0x1]
  %v41 = vlaneseq
  %v42 = vshrl.u32 %v41, 7
  %v43 = vsub.s32 0, %v42
  %v44 = vrot.slane %v39, %v43
  %v54 = vunpack.c.l.b16 %v15
  %v55 = vunpack.c.l.b16 %v16
  %v56 = vunpack.c.l.b16 %v17
  %v57 = vunpack.c.l.b16 %v18
  %v58 = vunpack.c.l.b16 %v19
  %v59 = vunpack.c.l.b16 %v20
  %v60 = vunpack.c.l.b16 %v21
  %v61 = vunpack.c.l.b16 %v22
  %v62 = vpack.c.b16 %v55, %v54
  %v63 = vpack.c.b16 %v57, %v56
  %v64 = vpack.c.b16 %v59, %v58
  %v65 = vpack.c.b16 %v61, %v60
  %v86 = vunpack.c.l.b16 %v23
  %v87 = vunpack.c.l.b16 %v24
  %v88 = vunpack.c.l.b16 %v25
  %v89 = vunpack.c.l.b16 %v26
  %v90 = vunpack.c.l.b16 %v27
  %v91 = vunpack.c.l.b16 %v28
  %v92 = vunpack.c.l.b16 %v29
  %v93 = vunpack.c.l.b16 %v30
  %v94 = vunpack.c.l.b16 %v31
  %v95 = vunpack.c.l.b16 %v32
  %v96 = vunpack.c.l.b16 %v33
  %v97 = vunpack.c.l.b16 %v34
  %v98 = vunpack.c.l.b16 %v35
  %v99 = vunpack.c.l.b16 %v36
  %v100 = vunpack.c.l.b16 %v37
  %v101 = vunpack.c.l.b16 %v38
  %v102 = vpack.c.b16 %v87, %v86
  %v103 = vpack.c.b16 %v89, %v88
  %v104 = vpack.c.b16 %v91, %v90
  %v105 = vpack.c.b16 %v93, %v92
  %v106 = vpack.c.b16 %v95, %v94
  %v107 = vpack.c.b16 %v97, %v96
  %v108 = vpack.c.b16 %v99, %v98
  %v109 = vpack.c.b16 %v101, %v100
  %118 = vmatprep.subr.bf16.mxu0 0
  %119 = vmatpush1.bf16.msra.mxu0 %v102
  %120 = vmatprep.subr.bf16.mxu0 0
  %121 = vmatpush1.bf16.msra.mxu0 %v103
  %122 = vmatprep.subr.bf16.mxu0 0
  %123 = vmatpush1.bf16.msra.mxu0 %v104
  %124 = vmatprep.subr.bf16.mxu0 0
  %125 = vmatpush1.bf16.msra.mxu0 %v105
  %126 = vmatprep.subr.bf16.mxu0 0
  %127 = vmatpush1.bf16.msra.mxu0 %v106
  %128 = vmatprep.subr.bf16.mxu0 0
  %129 = vmatpush1.bf16.msra.mxu0 %v107
  %130 = vmatprep.subr.bf16.mxu0 0
  %131 = vmatpush1.bf16.msra.mxu0 %v108
  %132 = vmatprep.subr.bf16.mxu0 0
  %133 = vmatpush1.bf16.msra.mxu0 %v109
  %134 = vmatprep.subr.bf16.mxu0 0
  %135 = vmatpush1.bf16.msra.mxu0 0
  %136 = vmatprep.subr.bf16.mxu0 0
  %137 = vmatpush1.bf16.msra.mxu0 0
  %138 = vmatprep.subr.bf16.mxu0 0
  %139 = vmatpush1.bf16.msra.mxu0 0
  %140 = vmatprep.subr.bf16.mxu0 0
  %141 = vmatpush1.bf16.msra.mxu0 0
  %142 = vmatprep.subr.bf16.mxu0 0
  %143 = vmatpush1.bf16.msra.mxu0 0
  %144 = vmatprep.subr.bf16.mxu0 0
  %145 = vmatpush1.bf16.msra.mxu0 0
  %146 = vmatprep.subr.bf16.mxu0 0
  %147 = vmatpush1.bf16.msra.mxu0 0
  %148 = vmatprep.subr.bf16.mxu0 0
  %149 = vmatpush1.bf16.msra.mxu0 0
  %150 = vmatprep.mubr.bf16.mxu0 0
  %151 = vmatmul.mubr.bf16.gmra.mrb[0].mxu0 %v62
  %v152 = vpop.f32.mrb[0].mxu0
  %v153 = vadd.f32 %v44, %v152
  %v154 = vpop.f32.mrb[0].mxu0
  %v155 = vpop.f32.mrb[0].mxu0
  %v156 = vadd.f32 %v44, %v155
  %v157 = vpop.f32.mrb[0].mxu0
  %158 = vmatprep.mubr.bf16.mxu0 0
  %159 = vmatmul.mubr.bf16.gmra.mrb[0].mxu0 %v63
  %v160 = vpop.f32.mrb[0].mxu0
  %v161 = vadd.f32 %v44, %v160
  %v162 = vpop.f32.mrb[0].mxu0
  %v163 = vpop.f32.mrb[0].mxu0
  %v164 = vadd.f32 %v44, %v163
  %v165 = vpop.f32.mrb[0].mxu0
  %166 = vmatprep.mubr.bf16.mxu0 0
  %167 = vmatmul.mubr.bf16.gmra.mrb[0].mxu0 %v64
  %v168 = vpop.f32.mrb[0].mxu0
  %v169 = vadd.f32 %v44, %v168
  %v170 = vpop.f32.mrb[0].mxu0
  %v171 = vpop.f32.mrb[0].mxu0
  %v172 = vadd.f32 %v44, %v171
  %v173 = vpop.f32.mrb[0].mxu0
  %174 = vmatprep.mubr.bf16.mxu0 0
  %175 = vmatmul.mubr.bf16.gmra.mrb[0].mxu0 %v65
  %v176 = vpop.f32.mrb[0].mxu0
  %v177 = vadd.f32 %v44, %v176
  %v178 = vpop.f32.mrb[0].mxu0
  %v179 = vpop.f32.mrb[0].mxu0
  %v180 = vadd.f32 %v44, %v179
  %v181 = vpop.f32.mrb[0].mxu0
  %182 = vdwg.mxu0
  %v183 = vpack.c.bf16 %v156, %v153
  %v184 = vpack.c.bf16 %v164, %v161
  %v185 = vpack.c.bf16 %v172, %v169
  %v186 = vpack.c.bf16 %v180, %v177
  %v191 = vunpack.c.l.b16 %v183
  %v192 = vunpack.c.h.b16 %v183
  %v193 = vunpack.c.l.b16 %v184
  %v194 = vunpack.c.h.b16 %v184
  %v195 = vunpack.c.l.b16 %v185
  %v196 = vunpack.c.h.b16 %v185
  %v197 = vunpack.c.l.b16 %v186
  %v198 = vunpack.c.h.b16 %v186
  %v199 = vpack.c.b16 %v191, %v191
  %v200 = vpack.c.b16 %v192, %v192
  %v201 = vpack.c.b16 %v193, %v193
  %v202 = vpack.c.b16 %v194, %v194
  %v203 = vpack.c.b16 %v195, %v195
  %v204 = vpack.c.b16 %v196, %v196
  %v205 = vpack.c.b16 %v197, %v197
  %v206 = vpack.c.b16 %v198, %v198
  %215 = vst [vmem:[%s3] sm:$0xf] %v199
  %216 = vst [vmem:[%s3 + $0x4] sm:$0xf] %v200
  %217 = vst [vmem:[%s3 + $0x8] sm:$0xf] %v201
  %218 = vst [vmem:[%s3 + $0xc] sm:$0xf] %v202
  %219 = vst [vmem:[%s3 + $0x10] sm:$0xf] %v203
  %220 = vst [vmem:[%s3 + $0x14] sm:$0xf] %v204
  %221 = vst [vmem:[%s3 + $0x18] sm:$0xf] %v205
  %222 = vst [vmem:[%s3 + $0x1c] sm:$0xf] %v206
  // Predicated region
  $region14: #{rnn_lm_forward.3} parent=0 // pred_check
    _
  $region15: #{rnn_lm_forward.3} parent=0 // pred_check_branch
    %224 = sbr.rel (0) target = $region17
  $region16: #{rnn_lm_forward.3} parent=0 // pred_region
    _
  $region17: #{rnn_lm_forward.3} parent=0 // pred_fallthru
    _
  // Predicated region
  $region18: #{rnn_lm_forward.3} parent=0 // pred_check
    _
  $region19: #{rnn_lm_forward.3} parent=0 // pred_check_branch
    %226 = sbr.rel (0) target = $region21
  $region20: #{rnn_lm_forward.3} parent=0 // pred_region
    _
  $region21: #{rnn_lm_forward.3} parent=0 // pred_fallthru
    _

// kernel: rnn_lm_forward.5
$region0: #{rnn_lm_forward.5}
  #allocation0 [shape = 'u32[]', space=smem, size = 0x4, offset = 0x4, fixed_abs, tag = 'smem constant byte address 0x4 - core index']
  #allocation1 [shape = 'u32[144,128]{1,0:T(1,128)}', space=vmem, size = 0x12000, scoped, tag = 'internal scratch']
  %s0 = inlined_call_operand.vmem [shape: bf16[64,128], index: 0, kind: input, shape index: {}]
  %s1 = inlined_call_operand.vmem [shape: bf16[128,128], index: 1, kind: input, shape index: {}]
  %s2 = inlined_call_operand.vmem [shape: f32[1,128], index: 2, kind: input, shape index: {}]
  %s3 = inlined_call_operand.vmem [shape: f32[64,128], index: 3, kind: output, shape index: {}]
  %s4 = sld [smem:[#allocation0]]
  $region22: #{rnn_lm_forward.5} parent=0
    _
  %s6 = ssub.s32 1, %s4
  %s7 = scalar_select 0, %s6, %s4
  // Predicated region
  $region2: #{rnn_lm_forward.5} parent=0 // pred_check
    _
  $region3: #{rnn_lm_forward.5} parent=0 // pred_check_branch
    %9 = sbr.rel (0) target = $region5
  $region4: #{rnn_lm_forward.5} parent=0 // pred_region
    _
  $region5: #{rnn_lm_forward.5} parent=0 // pred_fallthru
    _
  // Predicated region
  $region6: #{rnn_lm_forward.5} parent=0 // pred_check
    _
  $region7: #{rnn_lm_forward.5} parent=0 // pred_check_branch
    %11 = sbr.rel (0) target = $region9
  $region8: #{rnn_lm_forward.5} parent=0 // pred_region
    _
  $region9: #{rnn_lm_forward.5} parent=0 // pred_fallthru
    _
  // Predicated region
  $region10: #{rnn_lm_forward.5} parent=0 // pred_check
    _
  $region11: #{rnn_lm_forward.5} parent=0 // pred_check_branch
    %13 = sbr.rel (0) target = $region13
  $region12: #{rnn_lm_forward.5} parent=0 // pred_region
    _
  $region13: #{rnn_lm_forward.5} parent=0 // pred_fallthru
    _
  %v15 = vld [vmem:[%s0] sm:$0xf]
  %v16 = vld [vmem:[%s0 + $0x4] sm:$0xf]
  %v17 = vld [vmem:[%s0 + $0x8] sm:$0xf]
  %v18 = vld [vmem:[%s0 + $0xc] sm:$0xf]
  %v19 = vld [vmem:[%s0 + $0x10] sm:$0xf]
  %v20 = vld [vmem:[%s0 + $0x14] sm:$0xf]
  %v21 = vld [vmem:[%s0 + $0x18] sm:$0xf]
  %v22 = vld [vmem:[%s0 + $0x1c] sm:$0xf]
  %v23 = vld [vmem:[%s1] sm:$0xf]
  %v24 = vld [vmem:[%s1 + $0x4] sm:$0xf]
  %v25 = vld [vmem:[%s1 + $0x8] sm:$0xf]
  %v26 = vld [vmem:[%s1 + $0xc] sm:$0xf]
  %v27 = vld [vmem:[%s1 + $0x10] sm:$0xf]
  %v28 = vld [vmem:[%s1 + $0x14] sm:$0xf]
  %v29 = vld [vmem:[%s1 + $0x18] sm:$0xf]
  %v30 = vld [vmem:[%s1 + $0x1c] sm:$0xf]
  %v31 = vld [vmem:[%s1 + $0x20] sm:$0xf]
  %v32 = vld [vmem:[%s1 + $0x24] sm:$0xf]
  %v33 = vld [vmem:[%s1 + $0x28] sm:$0xf]
  %v34 = vld [vmem:[%s1 + $0x2c] sm:$0xf]
  %v35 = vld [vmem:[%s1 + $0x30] sm:$0xf]
  %v36 = vld [vmem:[%s1 + $0x34] sm:$0xf]
  %v37 = vld [vmem:[%s1 + $0x38] sm:$0xf]
  %v38 = vld [vmem:[%s1 + $0x3c] sm:$0xf]
  %v39 = vld [vmem:[%s2] sm:$0x1]
  %v41 = vlaneseq
  %v42 = vshrl.u32 %v41, 7
  %v43 = vsub.s32 0, %v42
  %v44 = vrot.slane %v39, %v43
  %v54 = vunpack.c.l.b16 %v15
  %v55 = vunpack.c.l.b16 %v16
  %v56 = vunpack.c.l.b16 %v17
  %v57 = vunpack.c.l.b16 %v18
  %v58 = vunpack.c.l.b16 %v19
  %v59 = vunpack.c.l.b16 %v20
  %v60 = vunpack.c.l.b16 %v21
  %v61 = vunpack.c.l.b16 %v22
  %v62 = vpack.c.b16 %v55, %v54
  %v63 = vpack.c.b16 %v57, %v56
  %v64 = vpack.c.b16 %v59, %v58
  %v65 = vpack.c.b16 %v61, %v60
  %v86 = vunpack.c.l.b16 %v23
  %v87 = vunpack.c.l.b16 %v24
  %v88 = vunpack.c.l.b16 %v25
  %v89 = vunpack.c.l.b16 %v26
  %v90 = vunpack.c.l.b16 %v27
  %v91 = vunpack.c.l.b16 %v28
  %v92 = vunpack.c.l.b16 %v29
  %v93 = vunpack.c.l.b16 %v30
  %v94 = vunpack.c.l.b16 %v31
  %v95 = vunpack.c.l.b16 %v32
  %v96 = vunpack.c.l.b16 %v33
  %v97 = vunpack.c.l.b16 %v34
  %v98 = vunpack.c.l.b16 %v35
  %v99 = vunpack.c.l.b16 %v36
  %v100 = vunpack.c.l.b16 %v37
  %v101 = vunpack.c.l.b16 %v38
  %v102 = vpack.c.b16 %v87, %v86
  %v103 = vpack.c.b16 %v89, %v88
  %v104 = vpack.c.b16 %v91, %v90
  %v105 = vpack.c.b16 %v93, %v92
  %v106 = vpack.c.b16 %v95, %v94
  %v107 = vpack.c.b16 %v97, %v96
  %v108 = vpack.c.b16 %v99, %v98
  %v109 = vpack.c.b16 %v101, %v100
  %118 = vmatprep.subr.bf16.mxu0 0
  %119 = vmatpush1.bf16.msra.mxu0 %v102
  %120 = vmatprep.subr.bf16.mxu0 0
  %121 = vmatpush1.bf16.msra.mxu0 %v103
  %122 = vmatprep.subr.bf16.mxu0 0
  %123 = vmatpush1.bf16.msra.mxu0 %v104
  %124 = vmatprep.subr.bf16.mxu0 0
  %125 = vmatpush1.bf16.msra.mxu0 %v105
  %126 = vmatprep.subr.bf16.mxu0 0
  %127 = vmatpush1.bf16.msra.mxu0 %v106
  %128 = vmatprep.subr.bf16.mxu0 0
  %129 = vmatpush1.bf16.msra.mxu0 %v107
  %130 = vmatprep.subr.bf16.mxu0 0
  %131 = vmatpush1.bf16.msra.mxu0 %v108
  %132 = vmatprep.subr.bf16.mxu0 0
  %133 = vmatpush1.bf16.msra.mxu0 %v109
  %134 = vmatprep.subr.bf16.mxu0 0
  %135 = vmatpush1.bf16.msra.mxu0 0
  %136 = vmatprep.subr.bf16.mxu0 0
  %137 = vmatpush1.bf16.msra.mxu0 0
  %138 = vmatprep.subr.bf16.mxu0 0
  %139 = vmatpush1.bf16.msra.mxu0 0
  %140 = vmatprep.subr.bf16.mxu0 0
  %141 = vmatpush1.bf16.msra.mxu0 0
  %142 = vmatprep.subr.bf16.mxu0 0
  %143 = vmatpush1.bf16.msra.mxu0 0
  %144 = vmatprep.subr.bf16.mxu0 0
  %145 = vmatpush1.bf16.msra.mxu0 0
  %146 = vmatprep.subr.bf16.mxu0 0
  %147 = vmatpush1.bf16.msra.mxu0 0
  %148 = vmatprep.subr.bf16.mxu0 0
  %149 = vmatpush1.bf16.msra.mxu0 0
  %150 = vmatprep.mubr.bf16.mxu0 0
  %151 = vmatmul.mubr.bf16.gmra.mrb[0].mxu0 %v62
  %v152 = vpop.f32.mrb[0].mxu0
  %v153 = vadd.f32 %v44, %v152
  %v154 = vpop.f32.mrb[0].mxu0
  %v155 = vpop.f32.mrb[0].mxu0
  %v156 = vadd.f32 %v44, %v155
  %v157 = vpop.f32.mrb[0].mxu0
  %158 = vmatprep.mubr.bf16.mxu0 0
  %159 = vmatmul.mubr.bf16.gmra.mrb[0].mxu0 %v63
  %v160 = vpop.f32.mrb[0].mxu0
  %v161 = vadd.f32 %v44, %v160
  %v162 = vpop.f32.mrb[0].mxu0
  %v163 = vpop.f32.mrb[0].mxu0
  %v164 = vadd.f32 %v44, %v163
  %v165 = vpop.f32.mrb[0].mxu0
  %166 = vmatprep.mubr.bf16.mxu0 0
  %167 = vmatmul.mubr.bf16.gmra.mrb[0].mxu0 %v64
  %v168 = vpop.f32.mrb[0].mxu0
  %v169 = vadd.f32 %v44, %v168
  %v170 = vpop.f32.mrb[0].mxu0
  %v171 = vpop.f32.mrb[0].mxu0
  %v172 = vadd.f32 %v44, %v171
  %v173 = vpop.f32.mrb[0].mxu0
  %174 = vmatprep.mubr.bf16.mxu0 0
  %175 = vmatmul.mubr.bf16.gmra.mrb[0].mxu0 %v65
  %v176 = vpop.f32.mrb[0].mxu0
  %v177 = vadd.f32 %v44, %v176
  %v178 = vpop.f32.mrb[0].mxu0
  %v179 = vpop.f32.mrb[0].mxu0
  %v180 = vadd.f32 %v44, %v179
  %v181 = vpop.f32.mrb[0].mxu0
  %182 = vdwg.mxu0
  %183 = vst [vmem:[%s3] sm:$0xff] %v153
  %184 = vst [vmem:[%s3 + $0x8] sm:$0xff] %v156
  %185 = vst [vmem:[%s3 + $0x10] sm:$0xff] %v161
  %186 = vst [vmem:[%s3 + $0x18] sm:$0xff] %v164
  %187 = vst [vmem:[%s3 + $0x20] sm:$0xff] %v169
  %188 = vst [vmem:[%s3 + $0x28] sm:$0xff] %v172
  %189 = vst [vmem:[%s3 + $0x30] sm:$0xff] %v177
  %190 = vst [vmem:[%s3 + $0x38] sm:$0xff] %v180
  // Predicated region
  $region14: #{rnn_lm_forward.5} parent=0 // pred_check
    _
  $region15: #{rnn_lm_forward.5} parent=0 // pred_check_branch
    %192 = sbr.rel (0) target = $region17
  $region16: #{rnn_lm_forward.5} parent=0 // pred_region
    _
  $region17: #{rnn_lm_forward.5} parent=0 // pred_fallthru
    _
  // Predicated region
  $region18: #{rnn_lm_forward.5} parent=0 // pred_check
    _
  $region19: #{rnn_lm_forward.5} parent=0 // pred_check_branch
    %194 = sbr.rel (0) target = $region21
  $region20: #{rnn_lm_forward.5} parent=0 // pred_region
    _
  $region21: #{rnn_lm_forward.5} parent=0 // pred_fallthru
    _

// kernel: rnn_lm_forward.4
$region0: #{rnn_lm_forward.4}
  #allocation0 [shape = 'u32[]', space=smem, size = 0x4, offset = 0x4, fixed_abs, tag = 'smem constant byte address 0x4 - core index']
  #allocation1 [shape = 'u32[144,128]{1,0:T(1,128)}', space=vmem, size = 0x12000, scoped, tag = 'internal scratch']
  #allocation2 [shape = 'f32[8,128]{1,0:T(8,128)}', space=vmem, size = 0x1000, scoped, tag = 'scratch operand']
  %s0 = inlined_call_operand.vmem [shape: bf16[8,8,128], index: 0, kind: input, shape index: {}]
  %s1 = inlined_call_operand.vmem [shape: f32[8,128], index: 1, kind: input, shape index: {}]
  %s2 = inlined_call_operand.vmem [shape: bf16[128,128], index: 2, kind: input, shape index: {}]
  %s3 = inlined_call_operand.vmem [shape: bf16[8,8,128], index: 3, kind: output, shape index: {0}]
  %s4 = inlined_call_operand.vmem [shape: f32[8,128], index: 4, kind: output, shape index: {1}]
  %5 = xla_tuple %s3, %s4
  %s6 = sld [smem:[#allocation0]]
  $region34: #{rnn_lm_forward.4} parent=0
    _
  %s8 = ssub.s32 1, %s6
  %s9 = scalar_select 0, %s8, %s6
  // Predicated region
  $region2: #{rnn_lm_forward.4} parent=0 // pred_check
    _
  $region3: #{rnn_lm_forward.4} parent=0 // pred_check_branch
    %11 = sbr.rel (0) target = $region5
  $region4: #{rnn_lm_forward.4} parent=0 // pred_region
    _
  $region5: #{rnn_lm_forward.4} parent=0 // pred_fallthru
    _
  // Predicated region
  $region6: #{rnn_lm_forward.4} parent=0 // pred_check
    _
  $region7: #{rnn_lm_forward.4} parent=0 // pred_check_branch
    %13 = sbr.rel (0) target = $region9
  $region8: #{rnn_lm_forward.4} parent=0 // pred_region
    _
  $region9: #{rnn_lm_forward.4} parent=0 // pred_fallthru
    _
  // Predicated region
  $region10: #{rnn_lm_forward.4} parent=0 // pred_check
    _
  $region11: #{rnn_lm_forward.4} parent=0 // pred_check_branch
    %15 = sbr.rel (0) target = $region13
  $region12: #{rnn_lm_forward.4} parent=0 // pred_region
    _
  $region13: #{rnn_lm_forward.4} parent=0 // pred_fallthru
    _
  %p17 = scmp.eq.s32.totalorder 0, 0
  // Predicated region
  $region14: #{rnn_lm_forward.4} parent=0 // pred_check
    %p18 = pneg %p17
  $region15: #{rnn_lm_forward.4} parent=0 // pred_check_branch
    %20 = sbr.rel (%p18) target = $region17
  $region16: #{rnn_lm_forward.4} parent=0 // pred_region
    %v21 = vld [vmem:[%s1] sm:$0xff]
    %22 = vst [vmem:[#allocation2] sm:$0xff] %v21
  $region17: #{rnn_lm_forward.4} parent=0 // pred_fallthru
    _
  %v23 = vld [vmem:[%s2] sm:$0xf]
  %v24 = vld [vmem:[%s2 + $0x4] sm:$0xf]
  %v25 = vld [vmem:[%s2 + $0x8] sm:$0xf]
  %v26 = vld [vmem:[%s2 + $0xc] sm:$0xf]
  %v27 = vld [vmem:[%s2 + $0x10] sm:$0xf]
  %v28 = vld [vmem:[%s2 + $0x14] sm:$0xf]
  %v29 = vld [vmem:[%s2 + $0x18] sm:$0xf]
  %v30 = vld [vmem:[%s2 + $0x1c] sm:$0xf]
  %v31 = vld [vmem:[%s2 + $0x20] sm:$0xf]
  %v32 = vld [vmem:[%s2 + $0x24] sm:$0xf]
  %v33 = vld [vmem:[%s2 + $0x28] sm:$0xf]
  %v34 = vld [vmem:[%s2 + $0x2c] sm:$0xf]
  %v35 = vld [vmem:[%s2 + $0x30] sm:$0xf]
  %v36 = vld [vmem:[%s2 + $0x34] sm:$0xf]
  %v37 = vld [vmem:[%s2 + $0x38] sm:$0xf]
  %v38 = vld [vmem:[%s2 + $0x3c] sm:$0xf]
  %v39 = vld [vmem:[#allocation2] sm:$0xff]
  %s40 = smul.u32 0, 8
  %v41 = vld [vmem:[%s0] sm:$0xf]
  %v42 = vunpack.c.l.bf16 %v41
  %v43 = vpack.c.bf16 %v39, %v39
  %v60 = vunpack.c.l.b16 %v23
  %v61 = vunpack.c.l.b16 %v24
  %v62 = vunpack.c.l.b16 %v25
  %v63 = vunpack.c.l.b16 %v26
  %v64 = vunpack.c.l.b16 %v27
  %v65 = vunpack.c.l.b16 %v28
  %v66 = vunpack.c.l.b16 %v29
  %v67 = vunpack.c.l.b16 %v30
  %v68 = vunpack.c.l.b16 %v31
  %v69 = vunpack.c.l.b16 %v32
  %v70 = vunpack.c.l.b16 %v33
  %v71 = vunpack.c.l.b16 %v34
  %v72 = vunpack.c.l.b16 %v35
  %v73 = vunpack.c.l.b16 %v36
  %v74 = vunpack.c.l.b16 %v37
  %v75 = vunpack.c.l.b16 %v38
  %v76 = vpack.c.b16 %v61, %v60
  %v77 = vpack.c.b16 %v63, %v62
  %v78 = vpack.c.b16 %v65, %v64
  %v79 = vpack.c.b16 %v67, %v66
  %v80 = vpack.c.b16 %v69, %v68
  %v81 = vpack.c.b16 %v71, %v70
  %v82 = vpack.c.b16 %v73, %v72
  %v83 = vpack.c.b16 %v75, %v74
  %92 = vmatprep.subr.bf16.mxu0 0
  %93 = vmatpush1.bf16.msra.mxu0 %v76
  %94 = vmatprep.subr.bf16.mxu0 0
  %95 = vmatpush1.bf16.msra.mxu0 %v77
  %96 = vmatprep.subr.bf16.mxu0 0
  %97 = vmatpush1.bf16.msra.mxu0 %v78
  %98 = vmatprep.subr.bf16.mxu0 0
  %99 = vmatpush1.bf16.msra.mxu0 %v79
  %100 = vmatprep.subr.bf16.mxu0 0
  %101 = vmatpush1.bf16.msra.mxu0 %v80
  %102 = vmatprep.subr.bf16.mxu0 0
  %103 = vmatpush1.bf16.msra.mxu0 %v81
  %104 = vmatprep.subr.bf16.mxu0 0
  %105 = vmatpush1.bf16.msra.mxu0 %v82
  %106 = vmatprep.subr.bf16.mxu0 0
  %107 = vmatpush1.bf16.msra.mxu0 %v83
  %108 = vmatprep.subr.bf16.mxu0 0
  %109 = vmatpush1.bf16.msra.mxu0 0
  %110 = vmatprep.subr.bf16.mxu0 0
  %111 = vmatpush1.bf16.msra.mxu0 0
  %112 = vmatprep.subr.bf16.mxu0 0
  %113 = vmatpush1.bf16.msra.mxu0 0
  %114 = vmatprep.subr.bf16.mxu0 0
  %115 = vmatpush1.bf16.msra.mxu0 0
  %116 = vmatprep.subr.bf16.mxu0 0
  %117 = vmatpush1.bf16.msra.mxu0 0
  %118 = vmatprep.subr.bf16.mxu0 0
  %119 = vmatpush1.bf16.msra.mxu0 0
  %120 = vmatprep.subr.bf16.mxu0 0
  %121 = vmatpush1.bf16.msra.mxu0 0
  %122 = vmatprep.subr.bf16.mxu0 0
  %123 = vmatpush1.bf16.msra.mxu0 0
  %124 = vmatprep.mubr.bf16.mxu0 0
  %125 = vmatmul.mubr.bf16.gmra.mrb[0].mxu0 %v43
  %v126 = vpop.f32.mrb[0].mxu0
  %v127 = vadd.f32 0.0, %v126
  %v128 = vpop.f32.mrb[0].mxu0
  %v129 = vpop.f32.mrb[0].mxu0
  %v130 = vpop.f32.mrb[0].mxu0
  %131 = vdwg.mxu0
  %v132 = vadd.f32 %v42, %v127
  %v133 = vtanh.pop %v132
  %v134 = vpack.c.bf16 %v133, %v133
  %135 = vst [vmem:[%s3] sm:$0xf] %v134
  %p136 = scmp.lt.s32.totalorder %s40, 8
  %s137 = scalar_select %p136, 1, 0
  %v138 = vstv %s137
  %vm139 = vcmp.eq.s32.totalorder %v138, 1
  %v140 = vsel %vm139, %v133, %v39
  %s141 = scalar_lea.vmem %s0, 4
  %v142 = vld [vmem:[%s141] sm:$0xf]
  %v143 = vunpack.c.l.bf16 %v142
  %v144 = vpack.c.bf16 %v140, %v140
  %145 = vmatprep.subr.bf16.mxu0 0
  %146 = vmatpush1.bf16.msra.mxu0 %v76
  %147 = vmatprep.subr.bf16.mxu0 0
  %148 = vmatpush1.bf16.msra.mxu0 %v77
  %149 = vmatprep.subr.bf16.mxu0 0
  %150 = vmatpush1.bf16.msra.mxu0 %v78
  %151 = vmatprep.subr.bf16.mxu0 0
  %152 = vmatpush1.bf16.msra.mxu0 %v79
  %153 = vmatprep.subr.bf16.mxu0 0
  %154 = vmatpush1.bf16.msra.mxu0 %v80
  %155 = vmatprep.subr.bf16.mxu0 0
  %156 = vmatpush1.bf16.msra.mxu0 %v81
  %157 = vmatprep.subr.bf16.mxu0 0
  %158 = vmatpush1.bf16.msra.mxu0 %v82
  %159 = vmatprep.subr.bf16.mxu0 0
  %160 = vmatpush1.bf16.msra.mxu0 %v83
  %161 = vmatprep.subr.bf16.mxu0 0
  %162 = vmatpush1.bf16.msra.mxu0 0
  %163 = vmatprep.subr.bf16.mxu0 0
  %164 = vmatpush1.bf16.msra.mxu0 0
  %165 = vmatprep.subr.bf16.mxu0 0
  %166 = vmatpush1.bf16.msra.mxu0 0
  %167 = vmatprep.subr.bf16.mxu0 0
  %168 = vmatpush1.bf16.msra.mxu0 0
  %169 = vmatprep.subr.bf16.mxu0 0
  %170 = vmatpush1.bf16.msra.mxu0 0
  %171 = vmatprep.subr.bf16.mxu0 0
  %172 = vmatpush1.bf16.msra.mxu0 0
  %173 = vmatprep.subr.bf16.mxu0 0
  %174 = vmatpush1.bf16.msra.mxu0 0
  %175 = vmatprep.subr.bf16.mxu0 0
  %176 = vmatpush1.bf16.msra.mxu0 0
  %177 = vmatprep.mubr.bf16.mxu0 0
  %178 = vmatmul.mubr.bf16.gmra.mrb[0].mxu0 %v144
  %v179 = vpop.f32.mrb[0].mxu0
  %v180 = vadd.f32 0.0, %v179
  %v181 = vpop.f32.mrb[0].mxu0
  %v182 = vpop.f32.mrb[0].mxu0
  %v183 = vpop.f32.mrb[0].mxu0
  %184 = vdwg.mxu0
  %v185 = vadd.f32 %v143, %v180
  %v186 = vtanh.pop %v185
  %v187 = vpack.c.bf16 %v186, %v186
  %s188 = scalar_lea.vmem %s3, 4
  %189 = vst [vmem:[%s188] sm:$0xf] %v187
  %s190 = sadd.s32 %s40, 1
  %p191 = scmp.lt.s32.totalorder %s190, 8
  %s192 = scalar_select %p191, 1, 0
  %v193 = vstv %s192
  %vm194 = vcmp.eq.s32.totalorder %v193, 1
  %v195 = vsel %vm194, %v186, %v140
  %s196 = scalar_lea.vmem %s0, 8
  %v197 = vld [vmem:[%s196] sm:$0xf]
  %v198 = vunpack.c.l.bf16 %v197
  %v199 = vpack.c.bf16 %v195, %v195
  %200 = vmatprep.subr.bf16.mxu0 0
  %201 = vmatpush1.bf16.msra.mxu0 %v76
  %202 = vmatprep.subr.bf16.mxu0 0
  %203 = vmatpush1.bf16.msra.mxu0 %v77
  %204 = vmatprep.subr.bf16.mxu0 0
  %205 = vmatpush1.bf16.msra.mxu0 %v78
  %206 = vmatprep.subr.bf16.mxu0 0
  %207 = vmatpush1.bf16.msra.mxu0 %v79
  %208 = vmatprep.subr.bf16.mxu0 0
  %209 = vmatpush1.bf16.msra.mxu0 %v80
  %210 = vmatprep.subr.bf16.mxu0 0
  %211 = vmatpush1.bf16.msra.mxu0 %v81
  %212 = vmatprep.subr.bf16.mxu0 0
  %213 = vmatpush1.bf16.msra.mxu0 %v82
  %214 = vmatprep.subr.bf16.mxu0 0
  %215 = vmatpush1.bf16.msra.mxu0 %v83
  %216 = vmatprep.subr.bf16.mxu0 0
  %217 = vmatpush1.bf16.msra.mxu0 0
  %218 = vmatprep.subr.bf16.mxu0 0
  %219 = vmatpush1.bf16.msra.mxu0 0
  %220 = vmatprep.subr.bf16.mxu0 0
  %221 = vmatpush1.bf16.msra.mxu0 0
  %222 = vmatprep.subr.bf16.mxu0 0
  %223 = vmatpush1.bf16.msra.mxu0 0
  %224 = vmatprep.subr.bf16.mxu0 0
  %225 = vmatpush1.bf16.msra.mxu0 0
  %226 = vmatprep.subr.bf16.mxu0 0
  %227 = vmatpush1.bf16.msra.mxu0 0
  %228 = vmatprep.subr.bf16.mxu0 0
  %229 = vmatpush1.bf16.msra.mxu0 0
  %230 = vmatprep.subr.bf16.mxu0 0
  %231 = vmatpush1.bf16.msra.mxu0 0
  %232 = vmatprep.mubr.bf16.mxu0 0
  %233 = vmatmul.mubr.bf16.gmra.mrb[0].mxu0 %v199
  %v234 = vpop.f32.mrb[0].mxu0
  %v235 = vadd.f32 0.0, %v234
  %v236 = vpop.f32.mrb[0].mxu0
  %v237 = vpop.f32.mrb[0].mxu0
  %v238 = vpop.f32.mrb[0].mxu0
  %239 = vdwg.mxu0
  %v240 = vadd.f32 %v198, %v235
  %v241 = vtanh.pop %v240
  %v242 = vpack.c.bf16 %v241, %v241
  %s243 = scalar_lea.vmem %s3, 8
  %244 = vst [vmem:[%s243] sm:$0xf] %v242
  %s245 = sadd.s32 %s40, 2
  %p246 = scmp.lt.s32.totalorder %s245, 8
  %s247 = scalar_select %p246, 1, 0
  %v248 = vstv %s247
  %vm249 = vcmp.eq.s32.totalorder %v248, 1
  %v250 = vsel %vm249, %v241, %v195
  %s251 = scalar_lea.vmem %s0, 12
  %v252 = vld [vmem:[%s251] sm:$0xf]
  %v253 = vunpack.c.l.bf16 %v252
  %v254 = vpack.c.bf16 %v250, %v250
  %255 = vmatprep.subr.bf16.mxu0 0
  %256 = vmatpush1.bf16.msra.mxu0 %v76
  %257 = vmatprep.subr.bf16.mxu0 0
  %258 = vmatpush1.bf16.msra.mxu0 %v77
  %259 = vmatprep.subr.bf16.mxu0 0
  %260 = vmatpush1.bf16.msra.mxu0 %v78
  %261 = vmatprep.subr.bf16.mxu0 0
  %262 = vmatpush1.bf16.msra.mxu0 %v79
  %263 = vmatprep.subr.bf16.mxu0 0
  %264 = vmatpush1.bf16.msra.mxu0 %v80
  %265 = vmatprep.subr.bf16.mxu0 0
  %266 = vmatpush1.bf16.msra.mxu0 %v81
  %267 = vmatprep.subr.bf16.mxu0 0
  %268 = vmatpush1.bf16.msra.mxu0 %v82
  %269 = vmatprep.subr.bf16.mxu0 0
  %270 = vmatpush1.bf16.msra.mxu0 %v83
  %271 = vmatprep.subr.bf16.mxu0 0
  %272 = vmatpush1.bf16.msra.mxu0 0
  %273 = vmatprep.subr.bf16.mxu0 0
  %274 = vmatpush1.bf16.msra.mxu0 0
  %275 = vmatprep.subr.bf16.mxu0 0
  %276 = vmatpush1.bf16.msra.mxu0 0
  %277 = vmatprep.subr.bf16.mxu0 0
  %278 = vmatpush1.bf16.msra.mxu0 0
  %279 = vmatprep.subr.bf16.mxu0 0
  %280 = vmatpush1.bf16.msra.mxu0 0
  %281 = vmatprep.subr.bf16.mxu0 0
  %282 = vmatpush1.bf16.msra.mxu0 0
  %283 = vmatprep.subr.bf16.mxu0 0
  %284 = vmatpush1.bf16.msra.mxu0 0
  %285 = vmatprep.subr.bf16.mxu0 0
  %286 = vmatpush1.bf16.msra.mxu0 0
  %287 = vmatprep.mubr.bf16.mxu0 0
  %288 = vmatmul.mubr.bf16.gmra.mrb[0].mxu0 %v254
  %v289 = vpop.f32.mrb[0].mxu0
  %v290 = vadd.f32 0.0, %v289
  %v291 = vpop.f32.mrb[0].mxu0
  %v292 = vpop.f32.mrb[0].mxu0
  %v293 = vpop.f32.mrb[0].mxu0
  %294 = vdwg.mxu0
  %v295 = vadd.f32 %v253, %v290
  %v296 = vtanh.pop %v295
  %v297 = vpack.c.bf16 %v296, %v296
  %s298 = scalar_lea.vmem %s3, 12
  %299 = vst [vmem:[%s298] sm:$0xf] %v297
  %s300 = sadd.s32 %s40, 3
  %p301 = scmp.lt.s32.totalorder %s300, 8
  %s302 = scalar_select %p301, 1, 0
  %v303 = vstv %s302
  %vm304 = vcmp.eq.s32.totalorder %v303, 1
  %v305 = vsel %vm304, %v296, %v250
  %s306 = scalar_lea.vmem %s0, 16
  %v307 = vld [vmem:[%s306] sm:$0xf]
  %v308 = vunpack.c.l.bf16 %v307
  %v309 = vpack.c.bf16 %v305, %v305
  %310 = vmatprep.subr.bf16.mxu0 0
  %311 = vmatpush1.bf16.msra.mxu0 %v76
  %312 = vmatprep.subr.bf16.mxu0 0
  %313 = vmatpush1.bf16.msra.mxu0 %v77
  %314 = vmatprep.subr.bf16.mxu0 0
  %315 = vmatpush1.bf16.msra.mxu0 %v78
  %316 = vmatprep.subr.bf16.mxu0 0
  %317 = vmatpush1.bf16.msra.mxu0 %v79
  %318 = vmatprep.subr.bf16.mxu0 0
  %319 = vmatpush1.bf16.msra.mxu0 %v80
  %320 = vmatprep.subr.bf16.mxu0 0
  %321 = vmatpush1.bf16.msra.mxu0 %v81
  %322 = vmatprep.subr.bf16.mxu0 0
  %323 = vmatpush1.bf16.msra.mxu0 %v82
  %324 = vmatprep.subr.bf16.mxu0 0
  %325 = vmatpush1.bf16.msra.mxu0 %v83
  %326 = vmatprep.subr.bf16.mxu0 0
  %327 = vmatpush1.bf16.msra.mxu0 0
  %328 = vmatprep.subr.bf16.mxu0 0
  %329 = vmatpush1.bf16.msra.mxu0 0
  %330 = vmatprep.subr.bf16.mxu0 0
  %331 = vmatpush1.bf16.msra.mxu0 0
  %332 = vmatprep.subr.bf16.mxu0 0
  %333 = vmatpush1.bf16.msra.mxu0 0
  %334 = vmatprep.subr.bf16.mxu0 0
  %335 = vmatpush1.bf16.msra.mxu0 0
  %336 = vmatprep.subr.bf16.mxu0 0
  %337 = vmatpush1.bf16.msra.mxu0 0
  %338 = vmatprep.subr.bf16.mxu0 0
  %339 = vmatpush1.bf16.msra.mxu0 0
  %340 = vmatprep.subr.bf16.mxu0 0
  %341 = vmatpush1.bf16.msra.mxu0 0
  %342 = vmatprep.mubr.bf16.mxu0 0
  %343 = vmatmul.mubr.bf16.gmra.mrb[0].mxu0 %v309
  %v344 = vpop.f32.mrb[0].mxu0
  %v345 = vadd.f32 0.0, %v344
  %v346 = vpop.f32.mrb[0].mxu0
  %v347 = vpop.f32.mrb[0].mxu0
  %v348 = vpop.f32.mrb[0].mxu0
  %349 = vdwg.mxu0
  %v350 = vadd.f32 %v308, %v345
  %v351 = vtanh.pop %v350
  %v352 = vpack.c.bf16 %v351, %v351
  %s353 = scalar_lea.vmem %s3, 16
  %354 = vst [vmem:[%s353] sm:$0xf] %v352
  %s355 = sadd.s32 %s40, 4
  %p356 = scmp.lt.s32.totalorder %s355, 8
  %s357 = scalar_select %p356, 1, 0
  %v358 = vstv %s357
  %vm359 = vcmp.eq.s32.totalorder %v358, 1
  %v360 = vsel %vm359, %v351, %v305
  %s361 = scalar_lea.vmem %s0, 20
  %v362 = vld [vmem:[%s361] sm:$0xf]
  %v363 = vunpack.c.l.bf16 %v362
  %v364 = vpack.c.bf16 %v360, %v360
  %365 = vmatprep.subr.bf16.mxu0 0
  %366 = vmatpush1.bf16.msra.mxu0 %v76
  %367 = vmatprep.subr.bf16.mxu0 0
  %368 = vmatpush1.bf16.msra.mxu0 %v77
  %369 = vmatprep.subr.bf16.mxu0 0
  %370 = vmatpush1.bf16.msra.mxu0 %v78
  %371 = vmatprep.subr.bf16.mxu0 0
  %372 = vmatpush1.bf16.msra.mxu0 %v79
  %373 = vmatprep.subr.bf16.mxu0 0
  %374 = vmatpush1.bf16.msra.mxu0 %v80
  %375 = vmatprep.subr.bf16.mxu0 0
  %376 = vmatpush1.bf16.msra.mxu0 %v81
  %377 = vmatprep.subr.bf16.mxu0 0
  %378 = vmatpush1.bf16.msra.mxu0 %v82
  %379 = vmatprep.subr.bf16.mxu0 0
  %380 = vmatpush1.bf16.msra.mxu0 %v83
  %381 = vmatprep.subr.bf16.mxu0 0
  %382 = vmatpush1.bf16.msra.mxu0 0
  %383 = vmatprep.subr.bf16.mxu0 0
  %384 = vmatpush1.bf16.msra.mxu0 0
  %385 = vmatprep.subr.bf16.mxu0 0
  %386 = vmatpush1.bf16.msra.mxu0 0
  %387 = vmatprep.subr.bf16.mxu0 0
  %388 = vmatpush1.bf16.msra.mxu0 0
  %389 = vmatprep.subr.bf16.mxu0 0
  %390 = vmatpush1.bf16.msra.mxu0 0
  %391 = vmatprep.subr.bf16.mxu0 0
  %392 = vmatpush1.bf16.msra.mxu0 0
  %393 = vmatprep.subr.bf16.mxu0 0
  %394 = vmatpush1.bf16.msra.mxu0 0
  %395 = vmatprep.subr.bf16.mxu0 0
  %396 = vmatpush1.bf16.msra.mxu0 0
  %397 = vmatprep.mubr.bf16.mxu0 0
  %398 = vmatmul.mubr.bf16.gmra.mrb[0].mxu0 %v364
  %v399 = vpop.f32.mrb[0].mxu0
  %v400 = vadd.f32 0.0, %v399
  %v401 = vpop.f32.mrb[0].mxu0
  %v402 = vpop.f32.mrb[0].mxu0
  %v403 = vpop.f32.mrb[0].mxu0
  %404 = vdwg.mxu0
  %v405 = vadd.f32 %v363, %v400
  %v406 = vtanh.pop %v405
  %v407 = vpack.c.bf16 %v406, %v406
  %s408 = scalar_lea.vmem %s3, 20
  %409 = vst [vmem:[%s408] sm:$0xf] %v407
  %s410 = sadd.s32 %s40, 5
  %p411 = scmp.lt.s32.totalorder %s410, 8
  %s412 = scalar_select %p411, 1, 0
  %v413 = vstv %s412
  %vm414 = vcmp.eq.s32.totalorder %v413, 1
  %v415 = vsel %vm414, %v406, %v360
  %s416 = scalar_lea.vmem %s0, 24
  %v417 = vld [vmem:[%s416] sm:$0xf]
  %v418 = vunpack.c.l.bf16 %v417
  %v419 = vpack.c.bf16 %v415, %v415
  %420 = vmatprep.subr.bf16.mxu0 0
  %421 = vmatpush1.bf16.msra.mxu0 %v76
  %422 = vmatprep.subr.bf16.mxu0 0
  %423 = vmatpush1.bf16.msra.mxu0 %v77
  %424 = vmatprep.subr.bf16.mxu0 0
  %425 = vmatpush1.bf16.msra.mxu0 %v78
  %426 = vmatprep.subr.bf16.mxu0 0
  %427 = vmatpush1.bf16.msra.mxu0 %v79
  %428 = vmatprep.subr.bf16.mxu0 0
  %429 = vmatpush1.bf16.msra.mxu0 %v80
  %430 = vmatprep.subr.bf16.mxu0 0
  %431 = vmatpush1.bf16.msra.mxu0 %v81
  %432 = vmatprep.subr.bf16.mxu0 0
  %433 = vmatpush1.bf16.msra.mxu0 %v82
  %434 = vmatprep.subr.bf16.mxu0 0
  %435 = vmatpush1.bf16.msra.mxu0 %v83
  %436 = vmatprep.subr.bf16.mxu0 0
  %437 = vmatpush1.bf16.msra.mxu0 0
  %438 = vmatprep.subr.bf16.mxu0 0
  %439 = vmatpush1.bf16.msra.mxu0 0
  %440 = vmatprep.subr.bf16.mxu0 0
  %441 = vmatpush1.bf16.msra.mxu0 0
  %442 = vmatprep.subr.bf16.mxu0 0
  %443 = vmatpush1.bf16.msra.mxu0 0
  %444 = vmatprep.subr.bf16.mxu0 0
  %445 = vmatpush1.bf16.msra.mxu0 0
  %446 = vmatprep.subr.bf16.mxu0 0
  %447 = vmatpush1.bf16.msra.mxu0 0
  %448 = vmatprep.subr.bf16.mxu0 0
  %449 = vmatpush1.bf16.msra.mxu0 0
  %450 = vmatprep.subr.bf16.mxu0 0
  %451 = vmatpush1.bf16.msra.mxu0 0
  %452 = vmatprep.mubr.bf16.mxu0 0
  %453 = vmatmul.mubr.bf16.gmra.mrb[0].mxu0 %v419
  %v454 = vpop.f32.mrb[0].mxu0
  %v455 = vadd.f32 0.0, %v454
  %v456 = vpop.f32.mrb[0].mxu0
  %v457 = vpop.f32.mrb[0].mxu0
  %v458 = vpop.f32.mrb[0].mxu0
  %459 = vdwg.mxu0
  %v460 = vadd.f32 %v418, %v455
  %v461 = vtanh.pop %v460
  %v462 = vpack.c.bf16 %v461, %v461
  %s463 = scalar_lea.vmem %s3, 24
  %464 = vst [vmem:[%s463] sm:$0xf] %v462
  %s465 = sadd.s32 %s40, 6
  %p466 = scmp.lt.s32.totalorder %s465, 8
  %s467 = scalar_select %p466, 1, 0
  %v468 = vstv %s467
  %vm469 = vcmp.eq.s32.totalorder %v468, 1
  %v470 = vsel %vm469, %v461, %v415
  %s471 = scalar_lea.vmem %s0, 28
  %v472 = vld [vmem:[%s471] sm:$0xf]
  %v473 = vunpack.c.l.bf16 %v472
  %v474 = vpack.c.bf16 %v470, %v470
  %475 = vmatprep.subr.bf16.mxu0 0
  %476 = vmatpush1.bf16.msra.mxu0 %v76
  %477 = vmatprep.subr.bf16.mxu0 0
  %478 = vmatpush1.bf16.msra.mxu0 %v77
  %479 = vmatprep.subr.bf16.mxu0 0
  %480 = vmatpush1.bf16.msra.mxu0 %v78
  %481 = vmatprep.subr.bf16.mxu0 0
  %482 = vmatpush1.bf16.msra.mxu0 %v79
  %483 = vmatprep.subr.bf16.mxu0 0
  %484 = vmatpush1.bf16.msra.mxu0 %v80
  %485 = vmatprep.subr.bf16.mxu0 0
  %486 = vmatpush1.bf16.msra.mxu0 %v81
  %487 = vmatprep.subr.bf16.mxu0 0
  %488 = vmatpush1.bf16.msra.mxu0 %v82
  %489 = vmatprep.subr.bf16.mxu0 0
  %490 = vmatpush1.bf16.msra.mxu0 %v83
  %491 = vmatprep.subr.bf16.mxu0 0
  %492 = vmatpush1.bf16.msra.mxu0 0
  %493 = vmatprep.subr.bf16.mxu0 0
  %494 = vmatpush1.bf16.msra.mxu0 0
  %495 = vmatprep.subr.bf16.mxu0 0
  %496 = vmatpush1.bf16.msra.mxu0 0
  %497 = vmatprep.subr.bf16.mxu0 0
  %498 = vmatpush1.bf16.msra.mxu0 0
  %499 = vmatprep.subr.bf16.mxu0 0
  %500 = vmatpush1.bf16.msra.mxu0 0
  %501 = vmatprep.subr.bf16.mxu0 0
  %502 = vmatpush1.bf16.msra.mxu0 0
  %503 = vmatprep.subr.bf16.mxu0 0
  %504 = vmatpush1.bf16.msra.mxu0 0
  %505 = vmatprep.subr.bf16.mxu0 0
  %506 = vmatpush1.bf16.msra.mxu0 0
  %507 = vmatprep.mubr.bf16.mxu0 0
  %508 = vmatmul.mubr.bf16.gmra.mrb[0].mxu0 %v474
  %v509 = vpop.f32.mrb[0].mxu0
  %v510 = vadd.f32 0.0, %v509
  %v511 = vpop.f32.mrb[0].mxu0
  %v512 = vpop.f32.mrb[0].mxu0
  %v513 = vpop.f32.mrb[0].mxu0
  %514 = vdwg.mxu0
  %v515 = vadd.f32 %v473, %v510
  %v516 = vtanh.pop %v515
  %v517 = vpack.c.bf16 %v516, %v516
  %s518 = scalar_lea.vmem %s3, 28
  %519 = vst [vmem:[%s518] sm:$0xf] %v517
  %s520 = sadd.s32 %s40, 7
  %p521 = scmp.lt.s32.totalorder %s520, 8
  %s522 = scalar_select %p521, 1, 0
  %v523 = vstv %s522
  %vm524 = vcmp.eq.s32.totalorder %v523, 1
  %v525 = vsel %vm524, %v516, %v470
  %526 = vst [vmem:[#allocation2] sm:$0xff] %v525
  %527 = vst [vmem:[%s4] sm:$0xff] %v525
  // Predicated region
  $region18: #{rnn_lm_forward.4} parent=0 // pred_check
    _
  $region19: #{rnn_lm_forward.4} parent=0 // pred_check_branch
    %529 = sbr.rel (0) target = $region21
  $region20: #{rnn_lm_forward.4} parent=0 // pred_region
    _
  $region21: #{rnn_lm_forward.4} parent=0 // pred_fallthru
    _
  // Predicated region
  $region22: #{rnn_lm_forward.4} parent=0 // pred_check
    _
  $region23: #{rnn_lm_forward.4} parent=0 // pred_check_branch
    %531 = sbr.rel (0) target = $region25
  $region24: #{rnn_lm_forward.4} parent=0 // pred_region
    _
  $region25: #{rnn_lm_forward.4} parent=0 // pred_fallthru
    _
  // Predicated region
  $region26: #{rnn_lm_forward.4} parent=0 // pred_check
    _
  $region27: #{rnn_lm_forward.4} parent=0 // pred_check_branch
    %533 = sbr.rel (0) target = $region29
  $region28: #{rnn_lm_forward.4} parent=0 // pred_region
    _
  $region29: #{rnn_lm_forward.4} parent=0 // pred_fallthru
    _
  // Predicated region
  $region30: #{rnn_lm_forward.4} parent=0 // pred_check
    _
  $region31: #{rnn_lm_forward.4} parent=0 // pred_check_branch
    %535 = sbr.rel (0) target = $region33
  $region32: #{rnn_lm_forward.4} parent=0 // pred_region
    _
  $region33: #{rnn_lm_forward.4} parent=0 // pred_fallthru
    _

</llo_original>
